<compile_context>
chip_gen: v5e
topology: v5e:2x2
jax: 0.10.0
libtpu: 0.0.40
codegen_flags: <defaults>
</compile_context>

<pallas_src>
import numpy as np
import jax
import jax.numpy as jnp
from jax.experimental import pallas as pl
from jax.experimental.pallas import tpu as pltpu


# ----------------------------------------------------------------------------
# Fused kernel: mask -> 3 residual blocks (lane-packed) -> max-pool -> FC+ReLU
# ----------------------------------------------------------------------------
def _make_kernel(offsets):
    """offsets: static tuple of tap offsets s (conv tap reads x[l + s])."""

    def kernel(x_ref, mask_ref, w1_ref, b1_ref, w2_ref, b2_ref, bd_ref,
               fcw_ref, fcb_ref, out_ref):
        L = x_ref.shape[1]
        Fp = b1_ref.shape[-1]                       # lane-packed filter width

        # mask fold-in (identity mask when the caller passes None)
        x = x_ref[0] * mask_ref[0]                  # (L, Cin) f32

        def taps_bf16(z):
            # Concatenate shifted copies of z along K:
            #   out[l, j*C:(j+1)*C] = z[l + offsets[j], :]  (0 outside [0, L))
            # The shift is a sublane roll (XLU slot) + an iota mask (VPU slot),
            # both free next to the MXU-bound matmuls -- no shift matmul.
            li = jax.lax.broadcasted_iota(jnp.int32, z.shape, 0)
            cols = []
            for s in offsets:
                if s == 0:
                    cols.append(z)
                else:
                    zs = pltpu.roll(z, shift=(-s) % L, axis=0)   # zs[l]=z[(l+s)%L]
                    zs = jnp.where((li + s >= 0) & (li + s < L), zs, 0.0)
                    cols.append(zs)
            return jnp.concatenate(cols, axis=-1).astype(jnp.bfloat16)

        # ---- conv1 of all blocks + all downsamples: ONE matmul, N = 2*Fp ----
        # columns [0, Fp)   : conv1 filters of the 3 blocks (lane-packed)
        # columns [Fp, 2*Fp): downsample (1x1 conv), weights live only in the
        #                     offset-0 rows of the packed weight
        hr = jnp.dot(taps_bf16(x), w1_ref[...],
                     preferred_element_type=jnp.float32)         # (L, 2*Fp)
        h = jnp.maximum(hr[:, :Fp] + b1_ref[...], 0.0)           # (L, Fp)
        res = hr[:, Fp:] + bd_ref[...]                           # (L, Fp)

        # ---- conv2 of all blocks: ONE long-K matmul (block-diag packed) -----
        o = jnp.dot(taps_bf16(h), w2_ref[...],
                    preferred_element_type=jnp.float32)          # (L, Fp)
        y = jnp.maximum(o + b2_ref[...] + res, 0.0)              # (L, Fp)

        # ---- global max-pool over the sequence length ------------------------
        pooled = jnp.max(y, axis=0, keepdims=True)               # (1, Fp)

        # ---- FC + ReLU (dropout p=0.1 is identity at inference time) --------
        logits = jnp.dot(pooled.astype(jnp.bfloat16), fcw_ref[...],
                         preferred_element_type=jnp.float32) + fcb_ref[...]
        out_ref[0] = jnp.maximum(logits, 0.0)                    # (1, Opad)

    return kernel


def text_resnet_forward(x, packed, mask=None):
    # x: (B, L, input_dim) -- same tensor the PyTorch module receives.
    B, L, Cin = x.shape
    offsets = packed['offsets']
    Opad = packed['fc_b'].shape[-1]
    O = packed['out_dim']
    if mask is None:
        mask3 = jnp.ones((B, L, 1), jnp.float32)
    else:
        mask3 = mask.astype(jnp.float32).reshape(B, L, 1)

    out = pl.pallas_call(
        _make_kernel(offsets),
        out_shape=jax.ShapeDtypeStruct((B, 1, Opad), jnp.float32),
        grid=(B,),
        in_specs=[
            pl.BlockSpec((1, L, Cin), lambda b: (b, 0, 0)),        # x tile
            pl.BlockSpec((1, L, 1), lambda b: (b, 0, 0)),          # mask tile
            # weights: constant index_map -> DMA'd once, stay VMEM-resident
            pl.BlockSpec(packed['w1'].shape, lambda b: (0, 0)),
            pl.BlockSpec(packed['b1'].shape, lambda b: (0, 0)),
            pl.BlockSpec(packed['w2'].shape, lambda b: (0, 0)),
            pl.BlockSpec(packed['b2'].shape, lambda b: (0, 0)),
            pl.BlockSpec(packed['bd'].shape, lambda b: (0, 0)),
            pl.BlockSpec(packed['fc_w'].shape, lambda b: (0, 0)),
            pl.BlockSpec(packed['fc_b'].shape, lambda b: (0, 0)),
        ],
        out_specs=pl.BlockSpec((1, 1, Opad), lambda b: (b, 0, 0)),
        compiler_params=pltpu.CompilerParams(
            # Batch axis is independent -> shard across TensorCores on v7x.
            # NOTE(v7x/large L): add an L-tile axis ("arbitrary") with a VMEM
            # running-max scratch + pl.when init/finalize, and set
            # vmem_limit_bytes explicitly so tiles fit v7x's 64 MiB VMEM.
            dimension_semantics=("parallel",)),
    )(x.astype(jnp.float32), mask3,
      packed['w1'], packed['b1'], packed['w2'], packed['b2'],
      packed['bd'], packed['fc_w'], packed['fc_b'])

    return out.reshape(B, Opad)[:, :O]


# ----------------------------------------------------------------------------
# Parameter init (deterministic, synthetic) -- same layout as the PyTorch module
# ----------------------------------------------------------------------------
def init_params(key, input_dim, output_dim, kernel_sizes, num_filters):
    params = []
    for ks in kernel_sizes:
        key, k0, k1, k2, k3, k4, k5 = jax.random.split(key, 7)
        if input_dim != num_filters:
            wd = jax.random.normal(k4, (input_dim, num_filters), jnp.float32) * 0.1
            bd = jax.random.normal(k5, (1, num_filters), jnp.float32) * 0.1
        else:
            # downsample is None in the PyTorch module -> identity residual
            wd = jnp.eye(num_filters, dtype=jnp.float32)
            bd = jnp.zeros((1, num_filters), jnp.float32)
        params.append(dict(
            w1=jax.random.normal(k0, (ks, input_dim, num_filters), jnp.float32) * 0.1,
            b1=jax.random.normal(k1, (1, num_filters), jnp.float32) * 0.1,
            w2=jax.random.normal(k2, (ks, num_filters, num_filters), jnp.float32) * 0.1,
            b2=jax.random.normal(k3, (1, num_filters), jnp.float32) * 0.1,
            wd=wd, bd=bd,
        ))
    key, kw, kb = jax.random.split(key, 3)
    fc_w = jax.random.normal(kw, (num_filters * len(kernel_sizes), output_dim),
                             jnp.float32) * 0.1
    fc_b = jax.random.normal(kb, (1, output_dim), jnp.float32) * 0.1
    return params, fc_w, fc_b


# ----------------------------------------------------------------------------
# One-time weight packing for the fused kernel (done once, outside the kernel)
# ----------------------------------------------------------------------------
def pack_params(params, fc_w, fc_b, *, kernel_sizes, dilation, num_filters,
                input_dim, output_dim, lane_pad=128):
    n_blk = len(kernel_sizes)
    Cf = num_filters
    F = Cf * n_blk
    Fp = -(-F // lane_pad) * lane_pad            # lane-dense packed filter width
    O = output_dim
    Opad = -(-O // lane_pad) * lane_pad          # lane-dense output width

    pads = []
    for ks in kernel_sizes:
        # symmetric "same" padding reproduces PyTorch only if dilation*(ks-1) even
        assert (dilation * (ks - 1)) % 2 == 0, \
            "pack_params: dilation*(kernel_size-1) must be even"
        pads.append(dilation * (ks - 1) // 2)

    off_set = {0}                                # always keep offset 0 (downsample)
    for ks, p in zip(kernel_sizes, pads):
        for k in range(ks):
            off_set.add(k * dilation - p)
    offsets = tuple(sorted(off_set))
    n_off = len(offsets)
    j0 = offsets.index(0)

    # conv1 + downsample fused weight: K = n_off*Cin, N = 2*Fp (fills 256-wide MXU)
    w1c = np.zeros((n_off * input_dim, 2 * Fp), np.float32)
    # conv2 fused weight: K = n_off*Fp (block-diagonal per block), N = Fp
    w2c = np.zeros((n_off * Fp, Fp), np.float32)
    b1p = np.zeros((1, Fp), np.float32)
    b2p = np.zeros((1, Fp), np.float32)
    bdp = np.zeros((1, Fp), np.float32)

    for b, (ks, p) in enumerate(zip(kernel_sizes, pads)):
        lo, hi = b * Cf, (b + 1) * Cf
        b1p[:, lo:hi] = np.asarray(params[b]['b1'])
        b2p[:, lo:hi] = np.asarray(params[b]['b2'])
        bdp[:, lo:hi] = np.asarray(params[b]['bd'])
        # downsample (1x1 conv) lives in the offset-0 rows, columns [Fp, 2*Fp)
        w1c[j0 * input_dim:(j0 + 1) * input_dim, Fp + lo:Fp + hi] = \
            np.asarray(params[b]['wd'])
        for j, s in enumerate(offsets):
            if (s + p) % dilation:
                continue
            k = (s + p) // dilation
            if 0 <= k < ks:
                w1c[j * input_dim:(j + 1) * input_dim, lo:hi] = \
                    np.asarray(params[b]['w1'][k])
                w2c[j * Fp + lo:j * Fp + hi, lo:hi] = \
                    np.asarray(params[b]['w2'][k])          # block-diagonal

    fcwp = np.zeros((Fp, Opad), np.float32)
    fcwp[:F, :O] = np.asarray(fc_w)
    fcbp = np.zeros((1, Opad), np.float32)
    fcbp[:, :O] = np.asarray(fc_b)

    return dict(
        offsets=offsets, out_dim=O,
        # matmul operands in bf16 (native MXU path), biases stay f32
        w1=jnp.asarray(w1c, jnp.bfloat16), b1=jnp.asarray(b1p),
        w2=jnp.asarray(w2c, jnp.bfloat16), b2=jnp.asarray(b2p),
        bd=jnp.asarray(bdp),
        fc_w=jnp.asarray(fcwp, jnp.bfloat16), fc_b=jnp.asarray(fcbp),
    )


# ----------------------------------------------------------------------------
# Pure-JAX reference (NCL, lax conv, f32) for a correctness sanity check
# ----------------------------------------------------------------------------
def _ref_forward(x, params, fc_w, fc_b, kernel_sizes, dilation, mask=None):
    xt = jnp.transpose(x, (0, 2, 1))          # (B, C, L) like PyTorch post-transpose
    if mask is not None:
        xt = xt * mask[:, None, :]

    def conv1d(z, w_kio, bias, ks):
        pad = dilation * (ks - 1) // 2
        w_oik = jnp.transpose(w_kio, (2, 1, 0))   # (Cout, Cin, K)
        out = jax.lax.conv_general_dilated(
            z, w_oik, window_strides=(1,), padding=[(pad, pad)],
            rhs_dilation=(dilation,), dimension_numbers=('NCH', 'OIH', 'NCH'))
        return out + bias[0][None, :, None]

    feats = []
    for blk, ks in zip(params, kernel_sizes):
        h = jax.nn.relu(conv1d(xt, blk['w1'], blk['b1'], ks))
        o = conv1d(h, blk['w2'], blk['b2'], ks)
        res = jnp.einsum('bcl,cf->bfl', xt, blk['wd']) + blk['bd'][0][None, :, None]
        y = jax.nn.relu(o + res)
        feats.append(jnp.max(y, axis=2))
    feat = jnp.concatenate(feats, axis=1)
    return jax.nn.relu(feat @ fc_w + fc_b[0][None, :])


if __name__ == "__main__":
    B, L = 2, 16
    input_dim, output_dim = 8, 16
    num_filters = 32
    kernel_sizes = (2, 3, 4)
    dilation = 2

    key = jax.random.PRNGKey(0)
    key, kx = jax.random.split(key)
    x = jax.random.normal(kx, (B, L, input_dim), jnp.float32)
    params, fc_w, fc_b = init_params(key, input_dim, output_dim,
                                     kernel_sizes, num_filters)
    packed = pack_params(params, fc_w, fc_b,
                         kernel_sizes=kernel_sizes, dilation=dilation,
                         num_filters=num_filters, input_dim=input_dim,
                         output_dim=output_dim)

    out = text_resnet_forward(x, packed)
    out = jax.block_until_ready(out)
    assert out.shape == (B, output_dim)

    ref = _ref_forward(x, params, fc_w, fc_b, kernel_sizes, dilation)
    # bf16 MXU operands (f32 accumulate) -> loosened tolerance vs. f32 reference
    if not bool(jnp.allclose(out, ref, atol=8e-2, rtol=5e-2)):
        max_err = float(jnp.max(jnp.abs(out - ref)))
        raise AssertionError(
            f"Pallas output does not match JAX reference (max abs err {max_err})")

    print("KERNEL_OK")
</pallas_src>

<mosaic_0001>
module attributes {stable_mosaic.version = 11 : i64} {
  func.func @kernel(%arg0: i32, %arg1: memref<1x16x8xf32, #tpu.memory_space<vmem>>, %arg2: memref<1x16x1xf32, #tpu.memory_space<vmem>>, %arg3: memref<56x256xbf16, #tpu.memory_space<vmem>>, %arg4: memref<1x128xf32, #tpu.memory_space<vmem>>, %arg5: memref<896x128xbf16, #tpu.memory_space<vmem>>, %arg6: memref<1x128xf32, #tpu.memory_space<vmem>>, %arg7: memref<1x128xf32, #tpu.memory_space<vmem>>, %arg8: memref<128x128xbf16, #tpu.memory_space<vmem>>, %arg9: memref<1x128xf32, #tpu.memory_space<vmem>>, %arg10: memref<1x1x128xf32, #tpu.memory_space<vmem>>) attributes {dimension_semantics = [#tpu.dimension_semantics<parallel>], iteration_bounds = array<i64: 2>, scalar_prefetch = 0 : i64, scratch_operands = 0 : i64, tpu.core_type = #tpu.core_type<tc>, window_params = [{transform_indices = @transform_0, window_bounds = array<i64: 1, 16, 8>}, {transform_indices = @transform_1, window_bounds = array<i64: 1, 16, 1>}, {pipeline_mode = #tpu.pipeline_mode<synchronous>, transform_indices = @transform_2, window_bounds = array<i64: 56, 256>}, {pipeline_mode = #tpu.pipeline_mode<synchronous>, transform_indices = @transform_3, window_bounds = array<i64: 1, 128>}, {pipeline_mode = #tpu.pipeline_mode<synchronous>, transform_indices = @transform_4, window_bounds = array<i64: 896, 128>}, {pipeline_mode = #tpu.pipeline_mode<synchronous>, transform_indices = @transform_5, window_bounds = array<i64: 1, 128>}, {pipeline_mode = #tpu.pipeline_mode<synchronous>, transform_indices = @transform_6, window_bounds = array<i64: 1, 128>}, {pipeline_mode = #tpu.pipeline_mode<synchronous>, transform_indices = @transform_7, window_bounds = array<i64: 128, 128>}, {pipeline_mode = #tpu.pipeline_mode<synchronous>, transform_indices = @transform_8, window_bounds = array<i64: 1, 128>}, {transform_indices = @transform_9, window_bounds = array<i64: 1, 1, 128>}]} {
    %c0 = arith.constant 0 : index
    %c0_0 = arith.constant 0 : index
    %c0_1 = arith.constant 0 : index
    %0 = vector.load %arg1[%c0, %c0_0, %c0_1] : memref<1x16x8xf32, #tpu.memory_space<vmem>>, vector<1x16x8xf32>
    %1 = vector.shape_cast %0 : vector<1x16x8xf32> to vector<16x8xf32>
    %c0_2 = arith.constant 0 : index
    %c0_3 = arith.constant 0 : index
    %c0_4 = arith.constant 0 : index
    %2 = vector.load %arg2[%c0_2, %c0_3, %c0_4] : memref<1x16x1xf32, #tpu.memory_space<vmem>>, vector<1x16x1xf32>
    %3 = vector.shape_cast %2 : vector<1x16x1xf32> to vector<16x1xf32>
    %4 = vector.broadcast %3 : vector<16x1xf32> to vector<16x8xf32>
    %5 = arith.mulf %1, %4 : vector<16x8xf32>
    %6 = tpu.iota {dimensions = array<i32: 0>} : vector<16x8xi32>
    %c3_i32 = arith.constant 3 : i32
    %7 = tpu.dynamic_rotate %5 by %c3_i32 dim 0 : vector<16x8xf32>, i32 -> vector<16x8xf32>
    %c-3_i32 = arith.constant -3 : i32
    %8 = vector.broadcast %c-3_i32 : i32 to vector<16x8xi32>
    %9 = arith.addi %6, %8 : vector<16x8xi32>
    %c0_i32 = arith.constant 0 : i32
    %10 = vector.broadcast %c0_i32 : i32 to vector<16x8xi32>
    %11 = arith.cmpi sge, %9, %10 : vector<16x8xi32>
    %c-3_i32_5 = arith.constant -3 : i32
    %12 = vector.broadcast %c-3_i32_5 : i32 to vector<16x8xi32>
    %13 = arith.addi %6, %12 : vector<16x8xi32>
    %c16_i32 = arith.constant 16 : i32
    %14 = vector.broadcast %c16_i32 : i32 to vector<16x8xi32>
    %15 = arith.cmpi slt, %13, %14 : vector<16x8xi32>
    %16 = arith.andi %11, %15 : vector<16x8xi1>
    %cst = arith.constant 0.000000e+00 : f32
    %17 = vector.broadcast %cst : f32 to vector<16x8xf32>
    %18 = arith.select %16, %7, %17 : vector<16x8xi1>, vector<16x8xf32>
    %c2_i32 = arith.constant 2 : i32
    %19 = tpu.dynamic_rotate %5 by %c2_i32 dim 0 : vector<16x8xf32>, i32 -> vector<16x8xf32>
    %c-2_i32 = arith.constant -2 : i32
    %20 = vector.broadcast %c-2_i32 : i32 to vector<16x8xi32>
    %21 = arith.addi %6, %20 : vector<16x8xi32>
    %c0_i32_6 = arith.constant 0 : i32
    %22 = vector.broadcast %c0_i32_6 : i32 to vector<16x8xi32>
    %23 = arith.cmpi sge, %21, %22 : vector<16x8xi32>
    %c-2_i32_7 = arith.constant -2 : i32
    %24 = vector.broadcast %c-2_i32_7 : i32 to vector<16x8xi32>
    %25 = arith.addi %6, %24 : vector<16x8xi32>
    %c16_i32_8 = arith.constant 16 : i32
    %26 = vector.broadcast %c16_i32_8 : i32 to vector<16x8xi32>
    %27 = arith.cmpi slt, %25, %26 : vector<16x8xi32>
    %28 = arith.andi %23, %27 : vector<16x8xi1>
    %cst_9 = arith.constant 0.000000e+00 : f32
    %29 = vector.broadcast %cst_9 : f32 to vector<16x8xf32>
    %30 = arith.select %28, %19, %29 : vector<16x8xi1>, vector<16x8xf32>
    %c1_i32 = arith.constant 1 : i32
    %31 = tpu.dynamic_rotate %5 by %c1_i32 dim 0 : vector<16x8xf32>, i32 -> vector<16x8xf32>
    %c-1_i32 = arith.constant -1 : i32
    %32 = vector.broadcast %c-1_i32 : i32 to vector<16x8xi32>
    %33 = arith.addi %6, %32 : vector<16x8xi32>
    %c0_i32_10 = arith.constant 0 : i32
    %34 = vector.broadcast %c0_i32_10 : i32 to vector<16x8xi32>
    %35 = arith.cmpi sge, %33, %34 : vector<16x8xi32>
    %c-1_i32_11 = arith.constant -1 : i32
    %36 = vector.broadcast %c-1_i32_11 : i32 to vector<16x8xi32>
    %37 = arith.addi %6, %36 : vector<16x8xi32>
    %c16_i32_12 = arith.constant 16 : i32
    %38 = vector.broadcast %c16_i32_12 : i32 to vector<16x8xi32>
    %39 = arith.cmpi slt, %37, %38 : vector<16x8xi32>
    %40 = arith.andi %35, %39 : vector<16x8xi1>
    %cst_13 = arith.constant 0.000000e+00 : f32
    %41 = vector.broadcast %cst_13 : f32 to vector<16x8xf32>
    %42 = arith.select %40, %31, %41 : vector<16x8xi1>, vector<16x8xf32>
    %c15_i32 = arith.constant 15 : i32
    %43 = tpu.dynamic_rotate %5 by %c15_i32 dim 0 : vector<16x8xf32>, i32 -> vector<16x8xf32>
    %c1_i32_14 = arith.constant 1 : i32
    %44 = vector.broadcast %c1_i32_14 : i32 to vector<16x8xi32>
    %45 = arith.addi %6, %44 : vector<16x8xi32>
    %c0_i32_15 = arith.constant 0 : i32
    %46 = vector.broadcast %c0_i32_15 : i32 to vector<16x8xi32>
    %47 = arith.cmpi sge, %45, %46 : vector<16x8xi32>
    %c1_i32_16 = arith.constant 1 : i32
    %48 = vector.broadcast %c1_i32_16 : i32 to vector<16x8xi32>
    %49 = arith.addi %6, %48 : vector<16x8xi32>
    %c16_i32_17 = arith.constant 16 : i32
    %50 = vector.broadcast %c16_i32_17 : i32 to vector<16x8xi32>
    %51 = arith.cmpi slt, %49, %50 : vector<16x8xi32>
    %52 = arith.andi %47, %51 : vector<16x8xi1>
    %cst_18 = arith.constant 0.000000e+00 : f32
    %53 = vector.broadcast %cst_18 : f32 to vector<16x8xf32>
    %54 = arith.select %52, %43, %53 : vector<16x8xi1>, vector<16x8xf32>
    %c14_i32 = arith.constant 14 : i32
    %55 = tpu.dynamic_rotate %5 by %c14_i32 dim 0 : vector<16x8xf32>, i32 -> vector<16x8xf32>
    %c2_i32_19 = arith.constant 2 : i32
    %56 = vector.broadcast %c2_i32_19 : i32 to vector<16x8xi32>
    %57 = arith.addi %6, %56 : vector<16x8xi32>
    %c0_i32_20 = arith.constant 0 : i32
    %58 = vector.broadcast %c0_i32_20 : i32 to vector<16x8xi32>
    %59 = arith.cmpi sge, %57, %58 : vector<16x8xi32>
    %c2_i32_21 = arith.constant 2 : i32
    %60 = vector.broadcast %c2_i32_21 : i32 to vector<16x8xi32>
    %61 = arith.addi %6, %60 : vector<16x8xi32>
    %c16_i32_22 = arith.constant 16 : i32
    %62 = vector.broadcast %c16_i32_22 : i32 to vector<16x8xi32>
    %63 = arith.cmpi slt, %61, %62 : vector<16x8xi32>
    %64 = arith.andi %59, %63 : vector<16x8xi1>
    %cst_23 = arith.constant 0.000000e+00 : f32
    %65 = vector.broadcast %cst_23 : f32 to vector<16x8xf32>
    %66 = arith.select %64, %55, %65 : vector<16x8xi1>, vector<16x8xf32>
    %c13_i32 = arith.constant 13 : i32
    %67 = tpu.dynamic_rotate %5 by %c13_i32 dim 0 : vector<16x8xf32>, i32 -> vector<16x8xf32>
    %c3_i32_24 = arith.constant 3 : i32
    %68 = vector.broadcast %c3_i32_24 : i32 to vector<16x8xi32>
    %69 = arith.addi %6, %68 : vector<16x8xi32>
    %c0_i32_25 = arith.constant 0 : i32
    %70 = vector.broadcast %c0_i32_25 : i32 to vector<16x8xi32>
    %71 = arith.cmpi sge, %69, %70 : vector<16x8xi32>
    %c3_i32_26 = arith.constant 3 : i32
    %72 = vector.broadcast %c3_i32_26 : i32 to vector<16x8xi32>
    %73 = arith.addi %6, %72 : vector<16x8xi32>
    %c16_i32_27 = arith.constant 16 : i32
    %74 = vector.broadcast %c16_i32_27 : i32 to vector<16x8xi32>
    %75 = arith.cmpi slt, %73, %74 : vector<16x8xi32>
    %76 = arith.andi %71, %75 : vector<16x8xi1>
    %cst_28 = arith.constant 0.000000e+00 : f32
    %77 = vector.broadcast %cst_28 : f32 to vector<16x8xf32>
    %78 = arith.select %76, %67, %77 : vector<16x8xi1>, vector<16x8xf32>
    %79 = tpu.concatenate %18, %30, %42, %5, %54, %66, %78 in 1 : vector<16x8xf32>, vector<16x8xf32>, vector<16x8xf32>, vector<16x8xf32>, vector<16x8xf32>, vector<16x8xf32>, vector<16x8xf32> -> vector<16x56xf32>
    %80 = arith.truncf %79 : vector<16x56xf32> to vector<16x56xbf16>
    %c0_29 = arith.constant 0 : index
    %c0_30 = arith.constant 0 : index
    %81 = vector.load %arg3[%c0_29, %c0_30] : memref<56x256xbf16, #tpu.memory_space<vmem>>, vector<56x256xbf16>
    %cst_31 = arith.constant dense<0.000000e+00> : vector<16x256xf32>
    %82 = tpu.matmul %80, %81, %cst_31 {dimension_numbers = #tpu.dot_dimension_numbers<[1], [0], [0], [1], [0, 0, 1, 1], [], []>} : vector<16x56xbf16>, vector<56x256xbf16>, vector<16x256xf32> -> vector<16x256xf32>
    %83 = vector.extract_strided_slice %82 {offsets = [0, 0], sizes = [16, 128], strides = [1, 1]} : vector<16x256xf32> to vector<16x128xf32>
    %c0_32 = arith.constant 0 : index
    %c0_33 = arith.constant 0 : index
    %84 = vector.load %arg4[%c0_32, %c0_33] : memref<1x128xf32, #tpu.memory_space<vmem>>, vector<1x128xf32>
    %85 = vector.broadcast %84 : vector<1x128xf32> to vector<16x128xf32>
    %86 = arith.addf %83, %85 : vector<16x128xf32>
    %cst_34 = arith.constant 0.000000e+00 : f32
    %87 = vector.broadcast %cst_34 : f32 to vector<16x128xf32>
    %88 = arith.maximumf %86, %87 : vector<16x128xf32>
    %89 = vector.extract_strided_slice %82 {offsets = [0, 128], sizes = [16, 128], strides = [1, 1]} : vector<16x256xf32> to vector<16x128xf32>
    %c0_35 = arith.constant 0 : index
    %c0_36 = arith.constant 0 : index
    %90 = vector.load %arg7[%c0_35, %c0_36] : memref<1x128xf32, #tpu.memory_space<vmem>>, vector<1x128xf32>
    %91 = vector.broadcast %90 : vector<1x128xf32> to vector<16x128xf32>
    %92 = arith.addf %89, %91 : vector<16x128xf32>
    %93 = tpu.iota {dimensions = array<i32: 0>} : vector<16x128xi32>
    %c3_i32_37 = arith.constant 3 : i32
    %94 = tpu.dynamic_rotate %88 by %c3_i32_37 dim 0 : vector<16x128xf32>, i32 -> vector<16x128xf32>
    %c-3_i32_38 = arith.constant -3 : i32
    %95 = vector.broadcast %c-3_i32_38 : i32 to vector<16x128xi32>
    %96 = arith.addi %93, %95 : vector<16x128xi32>
    %c0_i32_39 = arith.constant 0 : i32
    %97 = vector.broadcast %c0_i32_39 : i32 to vector<16x128xi32>
    %98 = arith.cmpi sge, %96, %97 : vector<16x128xi32>
    %c-3_i32_40 = arith.constant -3 : i32
    %99 = vector.broadcast %c-3_i32_40 : i32 to vector<16x128xi32>
    %100 = arith.addi %93, %99 : vector<16x128xi32>
    %c16_i32_41 = arith.constant 16 : i32
    %101 = vector.broadcast %c16_i32_41 : i32 to vector<16x128xi32>
    %102 = arith.cmpi slt, %100, %101 : vector<16x128xi32>
    %103 = arith.andi %98, %102 : vector<16x128xi1>
    %cst_42 = arith.constant 0.000000e+00 : f32
    %104 = vector.broadcast %cst_42 : f32 to vector<16x128xf32>
    %105 = arith.select %103, %94, %104 : vector<16x128xi1>, vector<16x128xf32>
    %c2_i32_43 = arith.constant 2 : i32
    %106 = tpu.dynamic_rotate %88 by %c2_i32_43 dim 0 : vector<16x128xf32>, i32 -> vector<16x128xf32>
    %c-2_i32_44 = arith.constant -2 : i32
    %107 = vector.broadcast %c-2_i32_44 : i32 to vector<16x128xi32>
    %108 = arith.addi %93, %107 : vector<16x128xi32>
    %c0_i32_45 = arith.constant 0 : i32
    %109 = vector.broadcast %c0_i32_45 : i32 to vector<16x128xi32>
    %110 = arith.cmpi sge, %108, %109 : vector<16x128xi32>
    %c-2_i32_46 = arith.constant -2 : i32
    %111 = vector.broadcast %c-2_i32_46 : i32 to vector<16x128xi32>
    %112 = arith.addi %93, %111 : vector<16x128xi32>
    %c16_i32_47 = arith.constant 16 : i32
    %113 = vector.broadcast %c16_i32_47 : i32 to vector<16x128xi32>
    %114 = arith.cmpi slt, %112, %113 : vector<16x128xi32>
    %115 = arith.andi %110, %114 : vector<16x128xi1>
    %cst_48 = arith.constant 0.000000e+00 : f32
    %116 = vector.broadcast %cst_48 : f32 to vector<16x128xf32>
    %117 = arith.select %115, %106, %116 : vector<16x128xi1>, vector<16x128xf32>
    %c1_i32_49 = arith.constant 1 : i32
    %118 = tpu.dynamic_rotate %88 by %c1_i32_49 dim 0 : vector<16x128xf32>, i32 -> vector<16x128xf32>
    %c-1_i32_50 = arith.constant -1 : i32
    %119 = vector.broadcast %c-1_i32_50 : i32 to vector<16x128xi32>
    %120 = arith.addi %93, %119 : vector<16x128xi32>
    %c0_i32_51 = arith.constant 0 : i32
    %121 = vector.broadcast %c0_i32_51 : i32 to vector<16x128xi32>
    %122 = arith.cmpi sge, %120, %121 : vector<16x128xi32>
    %c-1_i32_52 = arith.constant -1 : i32
    %123 = vector.broadcast %c-1_i32_52 : i32 to vector<16x128xi32>
    %124 = arith.addi %93, %123 : vector<16x128xi32>
    %c16_i32_53 = arith.constant 16 : i32
    %125 = vector.broadcast %c16_i32_53 : i32 to vector<16x128xi32>
    %126 = arith.cmpi slt, %124, %125 : vector<16x128xi32>
    %127 = arith.andi %122, %126 : vector<16x128xi1>
    %cst_54 = arith.constant 0.000000e+00 : f32
    %128 = vector.broadcast %cst_54 : f32 to vector<16x128xf32>
    %129 = arith.select %127, %118, %128 : vector<16x128xi1>, vector<16x128xf32>
    %c15_i32_55 = arith.constant 15 : i32
    %130 = tpu.dynamic_rotate %88 by %c15_i32_55 dim 0 : vector<16x128xf32>, i32 -> vector<16x128xf32>
    %c1_i32_56 = arith.constant 1 : i32
    %131 = vector.broadcast %c1_i32_56 : i32 to vector<16x128xi32>
    %132 = arith.addi %93, %131 : vector<16x128xi32>
    %c0_i32_57 = arith.constant 0 : i32
    %133 = vector.broadcast %c0_i32_57 : i32 to vector<16x128xi32>
    %134 = arith.cmpi sge, %132, %133 : vector<16x128xi32>
    %c1_i32_58 = arith.constant 1 : i32
    %135 = vector.broadcast %c1_i32_58 : i32 to vector<16x128xi32>
    %136 = arith.addi %93, %135 : vector<16x128xi32>
    %c16_i32_59 = arith.constant 16 : i32
    %137 = vector.broadcast %c16_i32_59 : i32 to vector<16x128xi32>
    %138 = arith.cmpi slt, %136, %137 : vector<16x128xi32>
    %139 = arith.andi %134, %138 : vector<16x128xi1>
    %cst_60 = arith.constant 0.000000e+00 : f32
    %140 = vector.broadcast %cst_60 : f32 to vector<16x128xf32>
    %141 = arith.select %139, %130, %140 : vector<16x128xi1>, vector<16x128xf32>
    %c14_i32_61 = arith.constant 14 : i32
    %142 = tpu.dynamic_rotate %88 by %c14_i32_61 dim 0 : vector<16x128xf32>, i32 -> vector<16x128xf32>
    %c2_i32_62 = arith.constant 2 : i32
    %143 = vector.broadcast %c2_i32_62 : i32 to vector<16x128xi32>
    %144 = arith.addi %93, %143 : vector<16x128xi32>
    %c0_i32_63 = arith.constant 0 : i32
    %145 = vector.broadcast %c0_i32_63 : i32 to vector<16x128xi32>
    %146 = arith.cmpi sge, %144, %145 : vector<16x128xi32>
    %c2_i32_64 = arith.constant 2 : i32
    %147 = vector.broadcast %c2_i32_64 : i32 to vector<16x128xi32>
    %148 = arith.addi %93, %147 : vector<16x128xi32>
    %c16_i32_65 = arith.constant 16 : i32
    %149 = vector.broadcast %c16_i32_65 : i32 to vector<16x128xi32>
    %150 = arith.cmpi slt, %148, %149 : vector<16x128xi32>
    %151 = arith.andi %146, %150 : vector<16x128xi1>
    %cst_66 = arith.constant 0.000000e+00 : f32
    %152 = vector.broadcast %cst_66 : f32 to vector<16x128xf32>
    %153 = arith.select %151, %142, %152 : vector<16x128xi1>, vector<16x128xf32>
    %c13_i32_67 = arith.constant 13 : i32
    %154 = tpu.dynamic_rotate %88 by %c13_i32_67 dim 0 : vector<16x128xf32>, i32 -> vector<16x128xf32>
    %c3_i32_68 = arith.constant 3 : i32
    %155 = vector.broadcast %c3_i32_68 : i32 to vector<16x128xi32>
    %156 = arith.addi %93, %155 : vector<16x128xi32>
    %c0_i32_69 = arith.constant 0 : i32
    %157 = vector.broadcast %c0_i32_69 : i32 to vector<16x128xi32>
    %158 = arith.cmpi sge, %156, %157 : vector<16x128xi32>
    %c3_i32_70 = arith.constant 3 : i32
    %159 = vector.broadcast %c3_i32_70 : i32 to vector<16x128xi32>
    %160 = arith.addi %93, %159 : vector<16x128xi32>
    %c16_i32_71 = arith.constant 16 : i32
    %161 = vector.broadcast %c16_i32_71 : i32 to vector<16x128xi32>
    %162 = arith.cmpi slt, %160, %161 : vector<16x128xi32>
    %163 = arith.andi %158, %162 : vector<16x128xi1>
    %cst_72 = arith.constant 0.000000e+00 : f32
    %164 = vector.broadcast %cst_72 : f32 to vector<16x128xf32>
    %165 = arith.select %163, %154, %164 : vector<16x128xi1>, vector<16x128xf32>
    %166 = tpu.concatenate %105, %117, %129, %88, %141, %153, %165 in 1 : vector<16x128xf32>, vector<16x128xf32>, vector<16x128xf32>, vector<16x128xf32>, vector<16x128xf32>, vector<16x128xf32>, vector<16x128xf32> -> vector<16x896xf32>
    %167 = arith.truncf %166 : vector<16x896xf32> to vector<16x896xbf16>
    %c0_73 = arith.constant 0 : index
    %c0_74 = arith.constant 0 : index
    %168 = vector.load %arg5[%c0_73, %c0_74] : memref<896x128xbf16, #tpu.memory_space<vmem>>, vector<896x128xbf16>
    %cst_75 = arith.constant dense<0.000000e+00> : vector<16x128xf32>
    %169 = tpu.matmul %167, %168, %cst_75 {dimension_numbers = #tpu.dot_dimension_numbers<[1], [0], [0], [1], [0, 0, 1, 1], [], []>} : vector<16x896xbf16>, vector<896x128xbf16>, vector<16x128xf32> -> vector<16x128xf32>
    %c0_76 = arith.constant 0 : index
    %c0_77 = arith.constant 0 : index
    %170 = vector.load %arg6[%c0_76, %c0_77] : memref<1x128xf32, #tpu.memory_space<vmem>>, vector<1x128xf32>
    %171 = vector.broadcast %170 : vector<1x128xf32> to vector<16x128xf32>
    %172 = arith.addf %169, %171 : vector<16x128xf32>
    %173 = arith.addf %172, %92 : vector<16x128xf32>
    %cst_78 = arith.constant 0.000000e+00 : f32
    %174 = vector.broadcast %cst_78 : f32 to vector<16x128xf32>
    %175 = arith.maximumf %173, %174 : vector<16x128xf32>
    %cst_79 = arith.constant dense<0xFF800000> : vector<128xf32>
    %176 = vector.multi_reduction <maximumf>, %175, %cst_79 [0] : vector<16x128xf32> to vector<128xf32>
    %177 = vector.shape_cast %176 : vector<128xf32> to vector<1x128xf32>
    %178 = arith.truncf %177 : vector<1x128xf32> to vector<1x128xbf16>
    %c0_80 = arith.constant 0 : index
    %c0_81 = arith.constant 0 : index
    %179 = vector.load %arg8[%c0_80, %c0_81] : memref<128x128xbf16, #tpu.memory_space<vmem>>, vector<128x128xbf16>
    %cst_82 = arith.constant dense<0.000000e+00> : vector<1x128xf32>
    %180 = tpu.matmul %178, %179, %cst_82 {dimension_numbers = #tpu.dot_dimension_numbers<[1], [0], [0], [1], [0, 0, 1, 1], [], []>} : vector<1x128xbf16>, vector<128x128xbf16>, vector<1x128xf32> -> vector<1x128xf32>
    %c0_83 = arith.constant 0 : index
    %c0_84 = arith.constant 0 : index
    %181 = vector.load %arg9[%c0_83, %c0_84] : memref<1x128xf32, #tpu.memory_space<vmem>>, vector<1x128xf32>
    %182 = arith.addf %180, %181 : vector<1x128xf32>
    %cst_85 = arith.constant 0.000000e+00 : f32
    %183 = vector.broadcast %cst_85 : f32 to vector<1x128xf32>
    %184 = arith.maximumf %182, %183 : vector<1x128xf32>
    %c0_86 = arith.constant 0 : index
    %c0_87 = arith.constant 0 : index
    %c0_88 = arith.constant 0 : index
    %185 = vector.load %arg10[%c0_86, %c0_87, %c0_88] : memref<1x1x128xf32, #tpu.memory_space<vmem>>, vector<1x1x128xf32>
    %186 = vector.shape_cast %185 : vector<1x1x128xf32> to vector<1x128xf32>
    %187 = vector.shape_cast %184 : vector<1x128xf32> to vector<1x1x128xf32>
    tpu.vector_store %arg10[%c0_86, %c0_87, %c0_88], %187 {strides = array<i32>} : memref<1x1x128xf32, #tpu.memory_space<vmem>>, vector<1x1x128xf32>,
    return
  }
  func.func @transform_0(%arg0: i32) -> (i32, i32, i32) {
    %c0_i32 = arith.constant 0 : i32
    %c0_i32_0 = arith.constant 0 : i32
    %c0_i32_1 = arith.constant 0 : i32
    return %arg0, %c0_i32, %c0_i32_0 : i32, i32, i32
  }
  func.func @transform_1(%arg0: i32) -> (i32, i32, i32) {
    %c0_i32 = arith.constant 0 : i32
    %c0_i32_0 = arith.constant 0 : i32
    %c0_i32_1 = arith.constant 0 : i32
    return %arg0, %c0_i32, %c0_i32_0 : i32, i32, i32
  }
  func.func @transform_2(%arg0: i32) -> (i32, i32) {
    %c0_i32 = arith.constant 0 : i32
    %c0_i32_0 = arith.constant 0 : i32
    %c0_i32_1 = arith.constant 0 : i32
    return %c0_i32, %c0_i32_0 : i32, i32
  }
  func.func @transform_3(%arg0: i32) -> (i32, i32) {
    %c0_i32 = arith.constant 0 : i32
    %c0_i32_0 = arith.constant 0 : i32
    %c0_i32_1 = arith.constant 0 : i32
    return %c0_i32, %c0_i32_0 : i32, i32
  }
  func.func @transform_4(%arg0: i32) -> (i32, i32) {
    %c0_i32 = arith.constant 0 : i32
    %c0_i32_0 = arith.constant 0 : i32
    %c0_i32_1 = arith.constant 0 : i32
    return %c0_i32, %c0_i32_0 : i32, i32
  }
  func.func @transform_5(%arg0: i32) -> (i32, i32) {
    %c0_i32 = arith.constant 0 : i32
    %c0_i32_0 = arith.constant 0 : i32
    %c0_i32_1 = arith.constant 0 : i32
    return %c0_i32, %c0_i32_0 : i32, i32
  }
  func.func @transform_6(%arg0: i32) -> (i32, i32) {
    %c0_i32 = arith.constant 0 : i32
    %c0_i32_0 = arith.constant 0 : i32
    %c0_i32_1 = arith.constant 0 : i32
    return %c0_i32, %c0_i32_0 : i32, i32
  }
  func.func @transform_7(%arg0: i32) -> (i32, i32) {
    %c0_i32 = arith.constant 0 : i32
    %c0_i32_0 = arith.constant 0 : i32
    %c0_i32_1 = arith.constant 0 : i32
    return %c0_i32, %c0_i32_0 : i32, i32
  }
  func.func @transform_8(%arg0: i32) -> (i32, i32) {
    %c0_i32 = arith.constant 0 : i32
    %c0_i32_0 = arith.constant 0 : i32
    %c0_i32_1 = arith.constant 0 : i32
    return %c0_i32, %c0_i32_0 : i32, i32
  }
  func.func @transform_9(%arg0: i32) -> (i32, i32, i32) {
    %c0_i32 = arith.constant 0 : i32
    %c0_i32_0 = arith.constant 0 : i32
    %c0_i32_1 = arith.constant 0 : i32
    return %arg0, %c0_i32, %c0_i32_0 : i32, i32, i32
  }
}

</mosaic_0001>

<llo_original>
// kernel: tpu_custom_call.1
$region0: #{tpu_custom_call.1}
  #allocation0 [shape = 'u32[]', space=smem, size = 0x4, offset = 0x4, fixed_abs, tag = 'smem constant byte address 0x4 - core index']
  #allocation1 [shape = 'u32[72,128]{1,0:T(1,128)}', space=vmem, size = 0x9000, scoped, tag = 'internal scratch']
  %s0 = inlined_call_operand.vmem [shape: f32[2,16,8], index: 0, kind: input, shape index: {}]
  %s1 = inlined_call_operand.vmem [shape: f32[2,16,1], index: 1, kind: input, shape index: {}]
  %s2 = inlined_call_operand.hbm [shape: bf16[56,256], index: 2, kind: input, shape index: {}]
  %s3 = inlined_call_operand.vmem [shape: f32[1,128], index: 3, kind: input, shape index: {}]
  %s4 = inlined_call_operand.hbm [shape: bf16[896,128], index: 4, kind: input, shape index: {}]
  %s5 = inlined_call_operand.vmem [shape: f32[1,128], index: 5, kind: input, shape index: {}]
  %s6 = inlined_call_operand.vmem [shape: f32[1,128], index: 6, kind: input, shape index: {}]
  %s7 = inlined_call_operand.vmem [shape: bf16[128,128], index: 7, kind: input, shape index: {}]
  %s8 = inlined_call_operand.vmem [shape: f32[1,128], index: 8, kind: input, shape index: {}]
  %s9 = inlined_call_operand.hbm [shape: f32[2,1,128], index: 9, kind: output, shape index: {}]
  %s10 = sld [smem:[#allocation0]]
  $region77: #{tpu_custom_call.1} parent=0
    _
  %s12 = ssub.s32 1, %s10
  %s13 = scalar_select 0, %s12, %s10
  $region1: #{tpu_custom_call.1} parent=0
    #allocation2 [shape = 'u8[28672]{0}', space=vmem, size = 0x7000, scoped, tag = 'input window, operand 2, single buffered']
    #allocation3 [shape = 's32[2]{0}', space=sflag, size = 0x8, scoped, tag = 'scoped memory for tpu_custom_call.1']
    #allocation4 [shape = 's32[2]{0}', space=sflag, size = 0x8, scoped, tag = 'scoped memory for tpu_custom_call.1']
    #allocation5 [shape = 'u8[229376]{0}', space=vmem, size = 0x38000, scoped, tag = 'input window, operand 4, single buffered']
    #allocation6 [shape = 's32[1]{0}', space=sflag, size = 0x4, scoped, tag = 'scoped memory for tpu_custom_call.1']
    #allocation7 [shape = 'u8[1024]{0}', space=vmem, size = 0x400, scoped, tag = 'output window, operand 0']
    %14 = vsyncpa [#allocation3], 0
    %15 = vsyncpa [#allocation6], 0
    %16 = vsyncpa [#allocation4], 0
    %s17 = scalar_lea.sflag [#allocation4], 1
    %18 = vsyncpa %s17, 0
    loop: start=0, step=1, limit=4
    $region2: #{tpu_custom_call.1} parent=1 // loop_pre_header
      _
    $region3: #{tpu_custom_call.1} parent=1 // loop_header
      %s20 = sphi 0, %s24
      %p21 = scmp.ge.s32.totalorder %s20, 4
      %s30 = sphi 0, %s32
      %s33 = sphi 0, %s30
      %s34 = sphi 0, %s33
      %s50 = sphi 0, %s34
      %s56 = sphi 0, %s58
      %s59 = sphi 0, %s56
      %s60 = sphi 0, %s59
      %s76 = sphi 0, %s60
      %s80 = sphi 0, %s80
      %s82 = sphi 0, %s80
      %s83 = sphi 0, %s82
      %s97 = sphi 0, %s83
      %s101 = sphi 0, %s101
      %s103 = sphi 0, %s101
      %s104 = sphi 0, %s103
      %s118 = sphi 0, %s104
      %s122 = sphi 0, %s122
      %s124 = sphi 0, %s122
      %s125 = sphi 0, %s124
      %s139 = sphi 0, %s125
      %s143 = sphi 0, %s143
      %s145 = sphi 0, %s143
      %s146 = sphi 0, %s145
      %s160 = sphi 0, %s146
      %s164 = sphi 0, %s164
      %s166 = sphi 0, %s164
      %s167 = sphi 0, %s166
      %s181 = sphi 0, %s167
      %s185 = sphi 0, %s185
      %s187 = sphi 0, %s185
      %s188 = sphi 0, %s187
      %s202 = sphi 0, %s188
      %s206 = sphi 0, %s206
      %s208 = sphi 0, %s206
      %s209 = sphi 0, %s208
      %s223 = sphi 0, %s209
      %s229 = sphi 0, %s231
      %s232 = sphi 0, %s229
      %s233 = sphi 0, %s232
      %s249 = sphi 0, %s233
    $region4: #{tpu_custom_call.1} parent=1 // loop_header_branch
      %23 = sbr.rel (%p21) target = $region8
    $region5: #{tpu_custom_call.1} parent=1 // loop_body
      %s25 = ssub.s32 %s20, 1
      %s26 = ssub.s32 %s20, 2
      %s27 = sadd.s32 %s20, 1
      %s28 = ssub.s32 %s20, %s27
      %p29 = scmp.eq.s32.totalorder %s28, 0
      %s31 = sadd.s32 %s30, 1
      %s32 = scalar_select %p29, %s30, %s31
      %p35 = pneg %p29
      %p36 = scmp.eq.s32.totalorder %s20, 1
      %p37 = por %p35, %p36
      %p38 = scmp.ne.s32.totalorder %s30, %s33
      %p39 = scmp.eq.s32.totalorder %s20, 0
      %p40 = por %p38, %p39
      %p41 = scmp.ne.s32.totalorder %s30, %s33
      %p42 = scmp.eq.s32.totalorder %s25, 1
      %p43 = por %p41, %p42
      %p44 = scmp.ne.s32.totalorder %s33, %s34
      %p45 = scmp.eq.s32.totalorder %s25, 0
      %p46 = por %p44, %p45
      %p47 = scmp.ne.s32.totalorder %s33, %s34
      %p48 = scmp.eq.s32.totalorder %s26, 1
      %p49 = por %p47, %p48
      %p51 = scmp.ne.s32.totalorder %s34, %s50
      %p52 = scmp.eq.s32.totalorder %s26, 0
      %p53 = por %p51, %p52
      %s54 = ssub.s32 %s20, %s27
      %p55 = scmp.eq.s32.totalorder %s54, 0
      %s57 = sadd.s32 %s56, 1
      %s58 = scalar_select %p55, %s56, %s57
      %p61 = pneg %p55
      %p62 = scmp.eq.s32.totalorder %s20, 1
      %p63 = por %p61, %p62
      %p64 = scmp.ne.s32.totalorder %s56, %s59
      %p65 = scmp.eq.s32.totalorder %s20, 0
      %p66 = por %p64, %p65
      %p67 = scmp.ne.s32.totalorder %s56, %s59
      %p68 = scmp.eq.s32.totalorder %s25, 1
      %p69 = por %p67, %p68
      %p70 = scmp.ne.s32.totalorder %s59, %s60
      %p71 = scmp.eq.s32.totalorder %s25, 0
      %p72 = por %p70, %p71
      %p73 = scmp.ne.s32.totalorder %s59, %s60
      %p74 = scmp.eq.s32.totalorder %s26, 1
      %p75 = por %p73, %p74
      %p77 = scmp.ne.s32.totalorder %s60, %s76
      %p78 = scmp.eq.s32.totalorder %s26, 0
      %p79 = por %p77, %p78
      %s81 = sadd.s32 %s80, 1
      %p84 = scmp.eq.s32.totalorder %s20, 1
      %p85 = scmp.ne.s32.totalorder %s80, %s82
      %p86 = scmp.eq.s32.totalorder %s20, 0
      %p87 = por %p85, %p86
      %p88 = scmp.ne.s32.totalorder %s80, %s82
      %p89 = scmp.eq.s32.totalorder %s25, 1
      %p90 = por %p88, %p89
      %p91 = scmp.ne.s32.totalorder %s82, %s83
      %p92 = scmp.eq.s32.totalorder %s25, 0
      %p93 = por %p91, %p92
      %p94 = scmp.ne.s32.totalorder %s82, %s83
      %p95 = scmp.eq.s32.totalorder %s26, 1
      %p96 = por %p94, %p95
      %p98 = scmp.ne.s32.totalorder %s83, %s97
      %p99 = scmp.eq.s32.totalorder %s26, 0
      %p100 = por %p98, %p99
      %s102 = sadd.s32 %s101, 1
      %p105 = scmp.eq.s32.totalorder %s20, 1
      %p106 = scmp.ne.s32.totalorder %s101, %s103
      %p107 = scmp.eq.s32.totalorder %s20, 0
      %p108 = por %p106, %p107
      %p109 = scmp.ne.s32.totalorder %s101, %s103
      %p110 = scmp.eq.s32.totalorder %s25, 1
      %p111 = por %p109, %p110
      %p112 = scmp.ne.s32.totalorder %s103, %s104
      %p113 = scmp.eq.s32.totalorder %s25, 0
      %p114 = por %p112, %p113
      %p115 = scmp.ne.s32.totalorder %s103, %s104
      %p116 = scmp.eq.s32.totalorder %s26, 1
      %p117 = por %p115, %p116
      %p119 = scmp.ne.s32.totalorder %s104, %s118
      %p120 = scmp.eq.s32.totalorder %s26, 0
      %p121 = por %p119, %p120
      %s123 = sadd.s32 %s122, 1
      %p126 = scmp.eq.s32.totalorder %s20, 1
      %p127 = scmp.ne.s32.totalorder %s122, %s124
      %p128 = scmp.eq.s32.totalorder %s20, 0
      %p129 = por %p127, %p128
      %p130 = scmp.ne.s32.totalorder %s122, %s124
      %p131 = scmp.eq.s32.totalorder %s25, 1
      %p132 = por %p130, %p131
      %p133 = scmp.ne.s32.totalorder %s124, %s125
      %p134 = scmp.eq.s32.totalorder %s25, 0
      %p135 = por %p133, %p134
      %p136 = scmp.ne.s32.totalorder %s124, %s125
      %p137 = scmp.eq.s32.totalorder %s26, 1
      %p138 = por %p136, %p137
      %p140 = scmp.ne.s32.totalorder %s125, %s139
      %p141 = scmp.eq.s32.totalorder %s26, 0
      %p142 = por %p140, %p141
      %s144 = sadd.s32 %s143, 1
      %p147 = scmp.eq.s32.totalorder %s20, 1
      %p148 = scmp.ne.s32.totalorder %s143, %s145
      %p149 = scmp.eq.s32.totalorder %s20, 0
      %p150 = por %p148, %p149
      %p151 = scmp.ne.s32.totalorder %s143, %s145
      %p152 = scmp.eq.s32.totalorder %s25, 1
      %p153 = por %p151, %p152
      %p154 = scmp.ne.s32.totalorder %s145, %s146
      %p155 = scmp.eq.s32.totalorder %s25, 0
      %p156 = por %p154, %p155
      %p157 = scmp.ne.s32.totalorder %s145, %s146
      %p158 = scmp.eq.s32.totalorder %s26, 1
      %p159 = por %p157, %p158
      %p161 = scmp.ne.s32.totalorder %s146, %s160
      %p162 = scmp.eq.s32.totalorder %s26, 0
      %p163 = por %p161, %p162
      %s165 = sadd.s32 %s164, 1
      %p168 = scmp.eq.s32.totalorder %s20, 1
      %p169 = scmp.ne.s32.totalorder %s164, %s166
      %p170 = scmp.eq.s32.totalorder %s20, 0
      %p171 = por %p169, %p170
      %p172 = scmp.ne.s32.totalorder %s164, %s166
      %p173 = scmp.eq.s32.totalorder %s25, 1
      %p174 = por %p172, %p173
      %p175 = scmp.ne.s32.totalorder %s166, %s167
      %p176 = scmp.eq.s32.totalorder %s25, 0
      %p177 = por %p175, %p176
      %p178 = scmp.ne.s32.totalorder %s166, %s167
      %p179 = scmp.eq.s32.totalorder %s26, 1
      %p180 = por %p178, %p179
      %p182 = scmp.ne.s32.totalorder %s167, %s181
      %p183 = scmp.eq.s32.totalorder %s26, 0
      %p184 = por %p182, %p183
      %s186 = sadd.s32 %s185, 1
      %p189 = scmp.eq.s32.totalorder %s20, 1
      %p190 = scmp.ne.s32.totalorder %s185, %s187
      %p191 = scmp.eq.s32.totalorder %s20, 0
      %p192 = por %p190, %p191
      %p193 = scmp.ne.s32.totalorder %s185, %s187
      %p194 = scmp.eq.s32.totalorder %s25, 1
      %p195 = por %p193, %p194
      %p196 = scmp.ne.s32.totalorder %s187, %s188
      %p197 = scmp.eq.s32.totalorder %s25, 0
      %p198 = por %p196, %p197
      %p199 = scmp.ne.s32.totalorder %s187, %s188
      %p200 = scmp.eq.s32.totalorder %s26, 1
      %p201 = por %p199, %p200
      %p203 = scmp.ne.s32.totalorder %s188, %s202
      %p204 = scmp.eq.s32.totalorder %s26, 0
      %p205 = por %p203, %p204
      %s207 = sadd.s32 %s206, 1
      %p210 = scmp.eq.s32.totalorder %s20, 1
      %p211 = scmp.ne.s32.totalorder %s206, %s208
      %p212 = scmp.eq.s32.totalorder %s20, 0
      %p213 = por %p211, %p212
      %p214 = scmp.ne.s32.totalorder %s206, %s208
      %p215 = scmp.eq.s32.totalorder %s25, 1
      %p216 = por %p214, %p215
      %p217 = scmp.ne.s32.totalorder %s208, %s209
      %p218 = scmp.eq.s32.totalorder %s25, 0
      %p219 = por %p217, %p218
      %p220 = scmp.ne.s32.totalorder %s208, %s209
      %p221 = scmp.eq.s32.totalorder %s26, 1
      %p222 = por %p220, %p221
      %p224 = scmp.ne.s32.totalorder %s209, %s223
      %p225 = scmp.eq.s32.totalorder %s26, 0
      %p226 = por %p224, %p225
      %s227 = ssub.s32 %s20, %s27
      %p228 = scmp.eq.s32.totalorder %s227, 0
      %s230 = sadd.s32 %s229, 1
      %s231 = scalar_select %p228, %s229, %s230
      %p234 = pneg %p228
      %p235 = scmp.eq.s32.totalorder %s20, 1
      %p236 = por %p234, %p235
      %p237 = scmp.ne.s32.totalorder %s229, %s232
      %p238 = scmp.eq.s32.totalorder %s20, 0
      %p239 = por %p237, %p238
      %p240 = scmp.ne.s32.totalorder %s229, %s232
      %p241 = scmp.eq.s32.totalorder %s25, 1
      %p242 = por %p240, %p241
      %p243 = scmp.ne.s32.totalorder %s232, %s233
      %p244 = scmp.eq.s32.totalorder %s25, 0
      %p245 = por %p243, %p244
      %p246 = scmp.ne.s32.totalorder %s232, %s233
      %p247 = scmp.eq.s32.totalorder %s26, 1
      %p248 = por %p246, %p247
      %p250 = scmp.ne.s32.totalorder %s233, %s249
      %p251 = scmp.eq.s32.totalorder %s26, 0
      %p252 = por %p250, %p251
      %p253 = scmp.le.s32.totalorder 1, %s20
      %p254 = scmp.lt.s32.totalorder %s20, 3
      %p255 = pnand %p253, %p254
      %p256 = pneg %p255
      // Predicated region
      $region9: #{tpu_custom_call.1} parent=5 // pred_check
        _
      $region10: #{tpu_custom_call.1} parent=5 // pred_check_branch
        %258 = sbr.rel (%p255) target = $region12
      $region11: #{tpu_custom_call.1} parent=5 // pred_region
        %s259 = ssub.s32 %s20, 1
        // Predicated region
        $region13: #{tpu_custom_call.1} parent=11 // pred_check
          %p260 = pneg %p93
        $region14: #{tpu_custom_call.1} parent=11 // pred_check_branch
          %262 = sbr.rel (%p260) target = $region16
        $region15: #{tpu_custom_call.1} parent=11 // pred_region
          %264 = vsyncadd [#allocation3], 0
          %s265 = sshll.u32 %s2, 4
          %s266 = int_to_ptr.hbm [resolvable:$true] %s265
          %s267 = sshll.u32 [#allocation2], 4
          %s268 = int_to_ptr.vmem [resolvable:$true] %s267
          %273 = dma.hbm_to_vmem [thread:$0]  %s266, 896, %s268, [#allocation3], 128, 128, 8
        $region16: #{tpu_custom_call.1} parent=11 // pred_fallthru
          _
        // Predicated region
        $region17: #{tpu_custom_call.1} parent=11 // pred_check
          %p274 = pneg %p114
        $region18: #{tpu_custom_call.1} parent=11 // pred_check_branch
          %276 = sbr.rel (%p274) target = $region20
        $region19: #{tpu_custom_call.1} parent=11 // pred_region
          _
        $region20: #{tpu_custom_call.1} parent=11 // pred_fallthru
          _
        // Predicated region
        $region21: #{tpu_custom_call.1} parent=11 // pred_check
          %p277 = pneg %p135
        $region22: #{tpu_custom_call.1} parent=11 // pred_check_branch
          %279 = sbr.rel (%p277) target = $region24
        $region23: #{tpu_custom_call.1} parent=11 // pred_region
          %281 = vsyncadd [#allocation6], 0
          %s282 = sshll.u32 %s4, 4
          %s283 = int_to_ptr.hbm [resolvable:$true] %s282
          %s284 = sshll.u32 [#allocation5], 4
          %s285 = int_to_ptr.vmem [resolvable:$true] %s284
          %290 = dma.hbm_to_vmem [thread:$0]  %s283, 7168, %s285, [#allocation6], 64, 64, 4
        $region24: #{tpu_custom_call.1} parent=11 // pred_fallthru
          _
        // Predicated region
        $region25: #{tpu_custom_call.1} parent=11 // pred_check
          %p291 = pneg %p156
        $region26: #{tpu_custom_call.1} parent=11 // pred_check_branch
          %293 = sbr.rel (%p291) target = $region28
        $region27: #{tpu_custom_call.1} parent=11 // pred_region
          _
        $region28: #{tpu_custom_call.1} parent=11 // pred_fallthru
          _
        // Predicated region
        $region29: #{tpu_custom_call.1} parent=11 // pred_check
          %p294 = pneg %p177
        $region30: #{tpu_custom_call.1} parent=11 // pred_check_branch
          %296 = sbr.rel (%p294) target = $region32
        $region31: #{tpu_custom_call.1} parent=11 // pred_region
          _
        $region32: #{tpu_custom_call.1} parent=11 // pred_fallthru
          _
        // Predicated region
        $region33: #{tpu_custom_call.1} parent=11 // pred_check
          %p297 = pneg %p198
        $region34: #{tpu_custom_call.1} parent=11 // pred_check_branch
          %299 = sbr.rel (%p297) target = $region36
        $region35: #{tpu_custom_call.1} parent=11 // pred_region
          _
        $region36: #{tpu_custom_call.1} parent=11 // pred_fallthru
          _
        // Predicated region
        $region37: #{tpu_custom_call.1} parent=11 // pred_check
          %p300 = pneg %p219
        $region38: #{tpu_custom_call.1} parent=11 // pred_check_branch
          %302 = sbr.rel (%p300) target = $region40
        $region39: #{tpu_custom_call.1} parent=11 // pred_region
          _
        $region40: #{tpu_custom_call.1} parent=11 // pred_fallthru
          _
      $region12: #{tpu_custom_call.1} parent=5 // pred_fallthru
        _
      %p303 = scmp.lt.s32.totalorder %s20, 2
      // Predicated region
      $region41: #{tpu_custom_call.1} parent=5 // pred_check
        %p304 = pneg %p303
      $region42: #{tpu_custom_call.1} parent=5 // pred_check_branch
        %306 = sbr.rel (%p304) target = $region44
      $region43: #{tpu_custom_call.1} parent=5 // pred_region
        // Predicated region
        $region45: #{tpu_custom_call.1} parent=43 // pred_check
          %p307 = pneg %p40
        $region46: #{tpu_custom_call.1} parent=43 // pred_check_branch
          %309 = sbr.rel (%p307) target = $region48
        $region47: #{tpu_custom_call.1} parent=43 // pred_region
          %p310 = scmp.lt.s32.totalorder %s20, 1
          %s311 = scalar_select %p310, %s20, 1
          %s312 = smul.addr %s311, 2
          %s313 = smul.addr %s312, 8
          %s314 = scalar_lea.vmem %s0, %s313
        $region48: #{tpu_custom_call.1} parent=43 // pred_fallthru
          _
        // Predicated region
        $region49: #{tpu_custom_call.1} parent=43 // pred_check
          %p315 = pneg %p66
        $region50: #{tpu_custom_call.1} parent=43 // pred_check_branch
          %317 = sbr.rel (%p315) target = $region52
        $region51: #{tpu_custom_call.1} parent=43 // pred_region
          %p318 = scmp.lt.s32.totalorder %s20, 1
          %s319 = scalar_select %p318, %s20, 1
          %s320 = smul.addr %s319, 2
          %s321 = smul.addr %s320, 8
          %s322 = scalar_lea.vmem %s1, %s321
        $region52: #{tpu_custom_call.1} parent=43 // pred_fallthru
          _
      $region44: #{tpu_custom_call.1} parent=5 // pred_fallthru
        _
      %p323 = scmp.le.s32.totalorder 1, %s20
      %p324 = scmp.lt.s32.totalorder %s20, 3
      %p325 = pnand %p323, %p324
      %p326 = pneg %p325
      // Predicated region
      $region53: #{tpu_custom_call.1} parent=5 // pred_check
        _
      $region54: #{tpu_custom_call.1} parent=5 // pred_check_branch
        %328 = sbr.rel (%p325) target = $region56
      $region55: #{tpu_custom_call.1} parent=5 // pred_region
        %s329 = ssub.s32 %s20, 1
        // Predicated region
        $region57: #{tpu_custom_call.1} parent=55 // pred_check
          %p330 = pneg %p93
        $region58: #{tpu_custom_call.1} parent=55 // pred_check_branch
          %332 = sbr.rel (%p330) target = $region60
        $region59: #{tpu_custom_call.1} parent=55 // pred_region
          %334 = dma.done [#allocation3], 896
        $region60: #{tpu_custom_call.1} parent=55 // pred_fallthru
          _
        // Predicated region
        $region61: #{tpu_custom_call.1} parent=55 // pred_check
          %p335 = pneg %p135
        $region62: #{tpu_custom_call.1} parent=55 // pred_check_branch
          %337 = sbr.rel (%p335) target = $region64
        $region63: #{tpu_custom_call.1} parent=55 // pred_region
          %339 = dma.done [#allocation6], 7168
        $region64: #{tpu_custom_call.1} parent=55 // pred_fallthru
          _
        %p340 = scmp.lt.s32.totalorder %s25, 1
        %s341 = scalar_select %p340, %s25, 1
        %s342 = smul.addr %s341, 2
        %s343 = smul.addr %s342, 8
        %s344 = scalar_lea.vmem %s0, %s343
        %p345 = pneg %p46
        %p346 = pneg %p43
        %p347 = scmp.lt.s32.totalorder %s25, 1
        %s348 = scalar_select %p347, %s25, 1
        %s349 = smul.addr %s348, 2
        %s350 = smul.addr %s349, 8
        %s351 = scalar_lea.vmem %s1, %s350
        %p352 = pneg %p72
        %p353 = pneg %p69
        %p354 = pneg %p93
        %p355 = pneg %p90
        %p356 = pneg %p114
        %p357 = pneg %p111
        %p358 = pneg %p135
        %p359 = pneg %p132
        %p360 = pneg %p156
        %p361 = pneg %p153
        %p362 = pneg %p177
        %p363 = pneg %p174
        %p364 = pneg %p198
        %p365 = pneg %p195
        %p366 = pneg %p219
        %p367 = pneg %p216
        %p368 = pneg %p245
        %p369 = pneg %p242
        %s370 = sand.u32 %s232, 1
        %s371 = scalar_lea.sflag [#allocation4], %s370
        %s372 = sand.u32 %s232, 1
        %s373 = scalar_lea.vmem [#allocation7], %s372
        %p374 = scmp.lt.s32.totalorder %s25, 1
        %s375 = scalar_select %p374, %s25, 1
        %s376 = smul.addr %s375, 2
        %s377 = smul.addr %s376, 8
        %s378 = scalar_lea.vmem %s0, %s377
        %p379 = scmp.lt.s32.totalorder %s25, 1
        %s380 = scalar_select %p379, %s25, 1
        %s381 = smul.addr %s380, 2
        %s382 = smul.addr %s381, 8
        %s383 = scalar_lea.vmem %s1, %s382
        %v385 = vld [vmem:[%s378] sm:$0xff]
        %v386 = vld [vmem:[%s378 + $0x8] sm:$0xff]
        %v387 = vld [vmem:[%s383] sm:$0xff]
        %v388 = vld [vmem:[%s383 + $0x8] sm:$0xff]
        %390 = vset.pattern.permute.xlu0 0
        %391 = vperm.xlu0 %390, %v387
        %v392 = vpop.permute.xlu0 %391
        %395 = vset.pattern.permute.xlu0 0
        %396 = vperm.xlu0 %395, %v388
        %v397 = vpop.permute.xlu0 %396
        %v399 = vmul.f32 %v385, %v392
        %v400 = vmul.f32 %v386, %v397
        %v401 = vlaneseq
        %v402 = vshrl.u32 %v401, 7
        %v403 = vadd.s32 %v402, 8
        %v404 = vrot.slane %v399, 5
        %v405 = vrot.slane %v400, 5
        %vm406 = vcmp.lt.s32.totalorder %v402, 3
        %v407 = vsel %vm406, %v404, %v405
        %v408 = vsel %vm406, %v405, %v404
        %v409 = vadd.s32 %v402, 4294967293
        %v410 = vadd.s32 %v403, 4294967293
        %vm411 = vcmp.ge.s32.totalorder %v409, 0
        %vm412 = vcmp.ge.s32.totalorder %v410, 0
        %vm413 = vcmp.lt.s32.totalorder %v409, 16
        %vm414 = vcmp.lt.s32.totalorder %v410, 16
        %vm415 = vmand %vm411, %vm413
        %vm416 = vmand %vm412, %vm414
        %v417 = vsel %vm415, %v408, 0.0
        %v418 = vsel %vm416, %v407, 0.0
        %v419 = vrot.slane %v399, 6
        %v420 = vrot.slane %v400, 6
        %vm421 = vcmp.lt.s32.totalorder %v402, 2
        %v422 = vsel %vm421, %v419, %v420
        %v423 = vsel %vm421, %v420, %v419
        %v424 = vadd.s32 %v402, 4294967294
        %v425 = vadd.s32 %v403, 4294967294
        %vm426 = vcmp.ge.s32.totalorder %v424, 0
        %vm427 = vcmp.ge.s32.totalorder %v425, 0
        %vm428 = vcmp.lt.s32.totalorder %v424, 16
        %vm429 = vcmp.lt.s32.totalorder %v425, 16
        %vm430 = vmand %vm426, %vm428
        %vm431 = vmand %vm427, %vm429
        %v432 = vsel %vm430, %v423, 0.0
        %v433 = vsel %vm431, %v422, 0.0
        %v434 = vrot.slane %v399, 7
        %v435 = vrot.slane %v400, 7
        %vm436 = vcmp.lt.s32.totalorder %v402, 1
        %v437 = vsel %vm436, %v434, %v435
        %v438 = vsel %vm436, %v435, %v434
        %v439 = vadd.s32 %v402, 4294967295
        %v440 = vadd.s32 %v403, 4294967295
        %vm441 = vcmp.ge.s32.totalorder %v439, 0
        %vm442 = vcmp.ge.s32.totalorder %v440, 0
        %vm443 = vcmp.lt.s32.totalorder %v439, 16
        %vm444 = vcmp.lt.s32.totalorder %v440, 16
        %vm445 = vmand %vm441, %vm443
        %vm446 = vmand %vm442, %vm444
        %v447 = vsel %vm445, %v438, 0.0
        %v448 = vsel %vm446, %v437, 0.0
        %v449 = vrot.slane %v399, 1
        %v450 = vrot.slane %v400, 1
        %vm451 = vcmp.lt.s32.totalorder %v402, 7
        %v452 = vsel %vm451, %v449, %v450
        %v453 = vsel %vm451, %v450, %v449
        %v454 = vadd.s32 %v402, 1
        %v455 = vadd.s32 %v403, 1
        %vm456 = vcmp.ge.s32.totalorder %v454, 0
        %vm457 = vcmp.ge.s32.totalorder %v455, 0
        %vm458 = vcmp.lt.s32.totalorder %v454, 16
        %vm459 = vcmp.lt.s32.totalorder %v455, 16
        %vm460 = vmand %vm456, %vm458
        %vm461 = vmand %vm457, %vm459
        %v462 = vsel %vm460, %v452, 0.0
        %v463 = vsel %vm461, %v453, 0.0
        %v464 = vrot.slane %v399, 2
        %v465 = vrot.slane %v400, 2
        %vm466 = vcmp.lt.s32.totalorder %v402, 6
        %v467 = vsel %vm466, %v464, %v465
        %v468 = vsel %vm466, %v465, %v464
        %v469 = vadd.s32 %v402, 2
        %v470 = vadd.s32 %v403, 2
        %vm471 = vcmp.ge.s32.totalorder %v469, 0
        %vm472 = vcmp.ge.s32.totalorder %v470, 0
        %vm473 = vcmp.lt.s32.totalorder %v469, 16
        %vm474 = vcmp.lt.s32.totalorder %v470, 16
        %vm475 = vmand %vm471, %vm473
        %vm476 = vmand %vm472, %vm474
        %v477 = vsel %vm475, %v467, 0.0
        %v478 = vsel %vm476, %v468, 0.0
        %v479 = vrot.slane %v399, 3
        %v480 = vrot.slane %v400, 3
        %vm481 = vcmp.lt.s32.totalorder %v402, 5
        %v482 = vsel %vm481, %v479, %v480
        %v483 = vsel %vm481, %v480, %v479
        %v484 = vadd.s32 %v402, 3
        %v485 = vadd.s32 %v403, 3
        %vm486 = vcmp.ge.s32.totalorder %v484, 0
        %vm487 = vcmp.ge.s32.totalorder %v485, 0
        %vm488 = vcmp.lt.s32.totalorder %v484, 16
        %vm489 = vcmp.lt.s32.totalorder %v485, 16
        %vm490 = vmand %vm486, %vm488
        %vm491 = vmand %vm487, %vm489
        %v492 = vsel %vm490, %v482, 0.0
        %v493 = vsel %vm491, %v483, 0.0
        %496 = vrot.lane.b32.xlu0 %v432, 8
        %v497 = vpop.permute.xlu0 %496
        %498 = vrot.lane.b32.xlu0 %v433, 8
        %v499 = vpop.permute.xlu0 %498
        %504 = vrot.lane.b32.xlu0 %v447, 16
        %v505 = vpop.permute.xlu0 %504
        %506 = vrot.lane.b32.xlu0 %v448, 16
        %v507 = vpop.permute.xlu0 %506
        %512 = vrot.lane.b32.xlu0 %v399, 24
        %v513 = vpop.permute.xlu0 %512
        %514 = vrot.lane.b32.xlu0 %v400, 24
        %v515 = vpop.permute.xlu0 %514
        %520 = vrot.lane.b32.xlu0 %v462, 32
        %v521 = vpop.permute.xlu0 %520
        %522 = vrot.lane.b32.xlu0 %v463, 32
        %v523 = vpop.permute.xlu0 %522
        %528 = vrot.lane.b32.xlu0 %v477, 40
        %v529 = vpop.permute.xlu0 %528
        %530 = vrot.lane.b32.xlu0 %v478, 40
        %v531 = vpop.permute.xlu0 %530
        %536 = vrot.lane.b32.xlu0 %v492, 48
        %v537 = vpop.permute.xlu0 %536
        %538 = vrot.lane.b32.xlu0 %v493, 48
        %v539 = vpop.permute.xlu0 %538
        %vm542 = vcmask 64512
        %v543 = vsel %vm542, %v417, %v497
        %v544 = vsel %vm542, %v418, %v499
        %vm545 = vcmask 130048
        %v546 = vsel %vm545, %v543, %v505
        %v547 = vsel %vm545, %v544, %v507
        %vm548 = vcmask 195584
        %v549 = vsel %vm548, %v546, %v513
        %v550 = vsel %vm548, %v547, %v515
        %vm551 = vcmask 261120
        %v552 = vsel %vm551, %v549, %v521
        %v553 = vsel %vm551, %v550, %v523
        %vm554 = vcmask 326656
        %v555 = vsel %vm554, %v552, %v529
        %v556 = vsel %vm554, %v553, %v531
        %vm557 = vcmask 392192
        %v558 = vsel %vm557, %v555, %v537
        %v559 = vsel %vm557, %v556, %v539
        %v560 = vpack.c.bf16 %v559, %v558
        %v561 = vld [vmem:[#allocation2] sm:$0xff]
        %v562 = vld [vmem:[#allocation2 + $0x8] sm:$0xff]
        %v563 = vld [vmem:[#allocation2 + $0x10] sm:$0xff]
        %v564 = vld [vmem:[#allocation2 + $0x18] sm:$0xff]
        %v565 = vld [vmem:[#allocation2 + $0x20] sm:$0xff]
        %v566 = vld [vmem:[#allocation2 + $0x28] sm:$0xff]
        %v567 = vld [vmem:[#allocation2 + $0x30] sm:$0xff]
        %v575 = vunpack.c.l.b16 %v561
        %v576 = vunpack.c.h.b16 %v561
        %v577 = vunpack.c.l.b16 %v562
        %v578 = vunpack.c.h.b16 %v562
        %v579 = vunpack.c.l.b16 %v563
        %v580 = vunpack.c.h.b16 %v563
        %v581 = vunpack.c.l.b16 %v564
        %v582 = vunpack.c.h.b16 %v564
        %v583 = vunpack.c.l.b16 %v565
        %v584 = vunpack.c.h.b16 %v565
        %v585 = vunpack.c.l.b16 %v566
        %v586 = vunpack.c.h.b16 %v566
        %v587 = vunpack.c.l.b16 %v567
        %v588 = vunpack.c.h.b16 %v567
        %v589 = vpack.c.b16 %v577, %v575
        %v590 = vpack.c.b16 %v578, %v576
        %v591 = vpack.c.b16 %v581, %v579
        %v592 = vpack.c.b16 %v582, %v580
        %v593 = vpack.c.b16 %v585, %v583
        %v594 = vpack.c.b16 %v586, %v584
        %v595 = vpack.c.b16 %v587, %v587
        %v596 = vpack.c.b16 %v588, %v588
        %vm603 = vcmask 457728
        %v605 = vsel %vm603, %v560, 0
        %vm607 = vcmask 1043456
        %v609 = vsel %vm607, %v595, 0
        %v612 = vsel %vm607, %v596, 0
        %614 = vmatpush.bf16.msra.mxu0 0
        %615 = vmatpush.bf16.msra.mxu0 0
        %616 = vmatpush.bf16.msra.mxu0 0
        %617 = vmatpush.bf16.msra.mxu0 0
        %618 = vmatpush.bf16.msra.mxu0 %v609
        %619 = vmatpush.bf16.msra.mxu0 %v593
        %620 = vmatpush.bf16.msra.mxu0 %v591
        %621 = vmatpush.bf16.msra.mxu0 %v589
        %622 = vmatmul.bf16.gmra.mxu0 %v605
        %v623 = vpop.f32.mrf.mxu0
        %v624 = vadd.f32 0.0, %v623
        %v625 = vpop.f32.mrf.mxu0
        %v626 = vadd.f32 0.0, %v625
        %627 = vdwg.mxu0
        %628 = vmatpush.bf16.msra.mxu0 0
        %629 = vmatpush.bf16.msra.mxu0 0
        %630 = vmatpush.bf16.msra.mxu0 0
        %631 = vmatpush.bf16.msra.mxu0 0
        %632 = vmatpush.bf16.msra.mxu0 %v612
        %633 = vmatpush.bf16.msra.mxu0 %v594
        %634 = vmatpush.bf16.msra.mxu0 %v592
        %635 = vmatpush.bf16.msra.mxu0 %v590
        %636 = vmatmul.bf16.gmra.mxu0 %v605
        %v637 = vpop.f32.mrf.mxu0
        %v638 = vadd.f32 0.0, %v637
        %v639 = vpop.f32.mrf.mxu0
        %v640 = vadd.f32 0.0, %v639
        %641 = vdwg.mxu0
        %v642 = vld [vmem:[%s3] sm:$0x1]
        %v644 = vperm.slane %v642, 0
        %v646 = vadd.f32 %v624, %v644
        %v647 = vadd.f32 %v626, %v644
        %v648 = vmax.f32 %v646, 0.0
        %v649 = vmax.f32 %v647, 0.0
        %v650 = vld [vmem:[%s6] sm:$0x1]
        %v652 = vperm.slane %v650, 0
        %v654 = vadd.f32 %v638, %v652
        %v655 = vadd.f32 %v640, %v652
        %v656 = vrot.slane %v648, 5
        %v657 = vrot.slane %v649, 5
        %v658 = vsel %vm406, %v656, %v657
        %v659 = vsel %vm406, %v657, %v656
        %v660 = vsel %vm415, %v659, 0.0
        %v661 = vsel %vm416, %v658, 0.0
        %v662 = vrot.slane %v648, 6
        %v663 = vrot.slane %v649, 6
        %v664 = vsel %vm421, %v662, %v663
        %v665 = vsel %vm421, %v663, %v662
        %v666 = vsel %vm430, %v665, 0.0
        %v667 = vsel %vm431, %v664, 0.0
        %v668 = vrot.slane %v648, 7
        %v669 = vrot.slane %v649, 7
        %v670 = vsel %vm436, %v668, %v669
        %v671 = vsel %vm436, %v669, %v668
        %v672 = vsel %vm445, %v671, 0.0
        %v673 = vsel %vm446, %v670, 0.0
        %v674 = vrot.slane %v648, 1
        %v675 = vrot.slane %v649, 1
        %v676 = vsel %vm451, %v674, %v675
        %v677 = vsel %vm451, %v675, %v674
        %v678 = vsel %vm460, %v676, 0.0
        %v679 = vsel %vm461, %v677, 0.0
        %v680 = vrot.slane %v648, 2
        %v681 = vrot.slane %v649, 2
        %v682 = vsel %vm466, %v680, %v681
        %v683 = vsel %vm466, %v681, %v680
        %v684 = vsel %vm475, %v682, 0.0
        %v685 = vsel %vm476, %v683, 0.0
        %v686 = vrot.slane %v648, 3
        %v687 = vrot.slane %v649, 3
        %v688 = vsel %vm481, %v686, %v687
        %v689 = vsel %vm481, %v687, %v686
        %v690 = vsel %vm490, %v688, 0.0
        %v691 = vsel %vm491, %v689, 0.0
        %v692 = vpack.c.bf16 %v661, %v660
        %v693 = vpack.c.bf16 %v667, %v666
        %v694 = vpack.c.bf16 %v673, %v672
        %v695 = vpack.c.bf16 %v649, %v648
        %v696 = vpack.c.bf16 %v679, %v678
        %v697 = vpack.c.bf16 %v685, %v684
        %v698 = vpack.c.bf16 %v691, %v690
        %v699 = vld [vmem:[#allocation5] sm:$0xf]
        %v700 = vld [vmem:[#allocation5 + $0x4] sm:$0xf]
        %v701 = vld [vmem:[#allocation5 + $0x8] sm:$0xf]
        %v702 = vld [vmem:[#allocation5 + $0xc] sm:$0xf]
        %v703 = vld [vmem:[#allocation5 + $0x10] sm:$0xf]
        %v704 = vld [vmem:[#allocation5 + $0x14] sm:$0xf]
        %v705 = vld [vmem:[#allocation5 + $0x18] sm:$0xf]
        %v706 = vld [vmem:[#allocation5 + $0x1c] sm:$0xf]
        %v707 = vld [vmem:[#allocation5 + $0x20] sm:$0xf]
        %v708 = vld [vmem:[#allocation5 + $0x24] sm:$0xf]
        %v709 = vld [vmem:[#allocation5 + $0x28] sm:$0xf]
        %v710 = vld [vmem:[#allocation5 + $0x2c] sm:$0xf]
        %v711 = vld [vmem:[#allocation5 + $0x30] sm:$0xf]
        %v712 = vld [vmem:[#allocation5 + $0x34] sm:$0xf]
        %v713 = vld [vmem:[#allocation5 + $0x38] sm:$0xf]
        %v714 = vld [vmem:[#allocation5 + $0x3c] sm:$0xf]
        %v715 = vld [vmem:[#allocation5 + $0x40] sm:$0xf]
        %v716 = vld [vmem:[#allocation5 + $0x44] sm:$0xf]
        %v717 = vld [vmem:[#allocation5 + $0x48] sm:$0xf]
        %v718 = vld [vmem:[#allocation5 + $0x4c] sm:$0xf]
        %v719 = vld [vmem:[#allocation5 + $0x50] sm:$0xf]
        %v720 = vld [vmem:[#allocation5 + $0x54] sm:$0xf]
        %v721 = vld [vmem:[#allocation5 + $0x58] sm:$0xf]
        %v722 = vld [vmem:[#allocation5 + $0x5c] sm:$0xf]
        %v723 = vld [vmem:[#allocation5 + $0x60] sm:$0xf]
        %v724 = vld [vmem:[#allocation5 + $0x64] sm:$0xf]
        %v725 = vld [vmem:[#allocation5 + $0x68] sm:$0xf]
        %v726 = vld [vmem:[#allocation5 + $0x6c] sm:$0xf]
        %v727 = vld [vmem:[#allocation5 + $0x70] sm:$0xf]
        %v728 = vld [vmem:[#allocation5 + $0x74] sm:$0xf]
        %v729 = vld [vmem:[#allocation5 + $0x78] sm:$0xf]
        %v730 = vld [vmem:[#allocation5 + $0x7c] sm:$0xf]
        %v731 = vld [vmem:[#allocation5 + $0x80] sm:$0xf]
        %v732 = vld [vmem:[#allocation5 + $0x84] sm:$0xf]
        %v733 = vld [vmem:[#allocation5 + $0x88] sm:$0xf]
        %v734 = vld [vmem:[#allocation5 + $0x8c] sm:$0xf]
        %v735 = vld [vmem:[#allocation5 + $0x90] sm:$0xf]
        %v736 = vld [vmem:[#allocation5 + $0x94] sm:$0xf]
        %v737 = vld [vmem:[#allocation5 + $0x98] sm:$0xf]
        %v738 = vld [vmem:[#allocation5 + $0x9c] sm:$0xf]
        %v739 = vld [vmem:[#allocation5 + $0xa0] sm:$0xf]
        %v740 = vld [vmem:[#allocation5 + $0xa4] sm:$0xf]
        %v741 = vld [vmem:[#allocation5 + $0xa8] sm:$0xf]
        %v742 = vld [vmem:[#allocation5 + $0xac] sm:$0xf]
        %v743 = vld [vmem:[#allocation5 + $0xb0] sm:$0xf]
        %v744 = vld [vmem:[#allocation5 + $0xb4] sm:$0xf]
        %v745 = vld [vmem:[#allocation5 + $0xb8] sm:$0xf]
        %v746 = vld [vmem:[#allocation5 + $0xbc] sm:$0xf]
        %v747 = vld [vmem:[#allocation5 + $0xc0] sm:$0xf]
        %v748 = vld [vmem:[#allocation5 + $0xc4] sm:$0xf]
        %v749 = vld [vmem:[#allocation5 + $0xc8] sm:$0xf]
        %v750 = vld [vmem:[#allocation5 + $0xcc] sm:$0xf]
        %v751 = vld [vmem:[#allocation5 + $0xd0] sm:$0xf]
        %v752 = vld [vmem:[#allocation5 + $0xd4] sm:$0xf]
        %v753 = vld [vmem:[#allocation5 + $0xd8] sm:$0xf]
        %v754 = vld [vmem:[#allocation5 + $0xdc] sm:$0xf]
        %v755 = vld [vmem:[#allocation5 + $0xe0] sm:$0xf]
        %v756 = vld [vmem:[#allocation5 + $0xe4] sm:$0xf]
        %v757 = vld [vmem:[#allocation5 + $0xe8] sm:$0xf]
        %v758 = vld [vmem:[#allocation5 + $0xec] sm:$0xf]
        %v759 = vld [vmem:[#allocation5 + $0xf0] sm:$0xf]
        %v760 = vld [vmem:[#allocation5 + $0xf4] sm:$0xf]
        %v761 = vld [vmem:[#allocation5 + $0xf8] sm:$0xf]
        %v762 = vld [vmem:[#allocation5 + $0xfc] sm:$0xf]
        %v763 = vld [vmem:[#allocation5 + $0x100] sm:$0xf]
        %v764 = vld [vmem:[#allocation5 + $0x104] sm:$0xf]
        %v765 = vld [vmem:[#allocation5 + $0x108] sm:$0xf]
        %v766 = vld [vmem:[#allocation5 + $0x10c] sm:$0xf]
        %v767 = vld [vmem:[#allocation5 + $0x110] sm:$0xf]
        %v768 = vld [vmem:[#allocation5 + $0x114] sm:$0xf]
        %v769 = vld [vmem:[#allocation5 + $0x118] sm:$0xf]
        %v770 = vld [vmem:[#allocation5 + $0x11c] sm:$0xf]
        %v771 = vld [vmem:[#allocation5 + $0x120] sm:$0xf]
        %v772 = vld [vmem:[#allocation5 + $0x124] sm:$0xf]
        %v773 = vld [vmem:[#allocation5 + $0x128] sm:$0xf]
        %v774 = vld [vmem:[#allocation5 + $0x12c] sm:$0xf]
        %v775 = vld [vmem:[#allocation5 + $0x130] sm:$0xf]
        %v776 = vld [vmem:[#allocation5 + $0x134] sm:$0xf]
        %v777 = vld [vmem:[#allocation5 + $0x138] sm:$0xf]
        %v778 = vld [vmem:[#allocation5 + $0x13c] sm:$0xf]
        %v779 = vld [vmem:[#allocation5 + $0x140] sm:$0xf]
        %v780 = vld [vmem:[#allocation5 + $0x144] sm:$0xf]
        %v781 = vld [vmem:[#allocation5 + $0x148] sm:$0xf]
        %v782 = vld [vmem:[#allocation5 + $0x14c] sm:$0xf]
        %v783 = vld [vmem:[#allocation5 + $0x150] sm:$0xf]
        %v784 = vld [vmem:[#allocation5 + $0x154] sm:$0xf]
        %v785 = vld [vmem:[#allocation5 + $0x158] sm:$0xf]
        %v786 = vld [vmem:[#allocation5 + $0x15c] sm:$0xf]
        %v787 = vld [vmem:[#allocation5 + $0x160] sm:$0xf]
        %v788 = vld [vmem:[#allocation5 + $0x164] sm:$0xf]
        %v789 = vld [vmem:[#allocation5 + $0x168] sm:$0xf]
        %v790 = vld [vmem:[#allocation5 + $0x16c] sm:$0xf]
        %v791 = vld [vmem:[#allocation5 + $0x170] sm:$0xf]
        %v792 = vld [vmem:[#allocation5 + $0x174] sm:$0xf]
        %v793 = vld [vmem:[#allocation5 + $0x178] sm:$0xf]
        %v794 = vld [vmem:[#allocation5 + $0x17c] sm:$0xf]
        %v795 = vld [vmem:[#allocation5 + $0x180] sm:$0xf]
        %v796 = vld [vmem:[#allocation5 + $0x184] sm:$0xf]
        %v797 = vld [vmem:[#allocation5 + $0x188] sm:$0xf]
        %v798 = vld [vmem:[#allocation5 + $0x18c] sm:$0xf]
        %v799 = vld [vmem:[#allocation5 + $0x190] sm:$0xf]
        %v800 = vld [vmem:[#allocation5 + $0x194] sm:$0xf]
        %v801 = vld [vmem:[#allocation5 + $0x198] sm:$0xf]
        %v802 = vld [vmem:[#allocation5 + $0x19c] sm:$0xf]
        %v803 = vld [vmem:[#allocation5 + $0x1a0] sm:$0xf]
        %v804 = vld [vmem:[#allocation5 + $0x1a4] sm:$0xf]
        %v805 = vld [vmem:[#allocation5 + $0x1a8] sm:$0xf]
        %v806 = vld [vmem:[#allocation5 + $0x1ac] sm:$0xf]
        %v807 = vld [vmem:[#allocation5 + $0x1b0] sm:$0xf]
        %v808 = vld [vmem:[#allocation5 + $0x1b4] sm:$0xf]
        %v809 = vld [vmem:[#allocation5 + $0x1b8] sm:$0xf]
        %v810 = vld [vmem:[#allocation5 + $0x1bc] sm:$0xf]
        %v811 = vld [vmem:[%s5] sm:$0x1]
        %v813 = vperm.slane %v811, 0
        %v927 = vunpack.c.l.b16 %v699
        %v928 = vunpack.c.l.b16 %v700
        %v929 = vunpack.c.l.b16 %v701
        %v930 = vunpack.c.l.b16 %v702
        %v931 = vunpack.c.l.b16 %v703
        %v932 = vunpack.c.l.b16 %v704
        %v933 = vunpack.c.l.b16 %v705
        %v934 = vunpack.c.l.b16 %v706
        %v935 = vunpack.c.l.b16 %v707
        %v936 = vunpack.c.l.b16 %v708
        %v937 = vunpack.c.l.b16 %v709
        %v938 = vunpack.c.l.b16 %v710
        %v939 = vunpack.c.l.b16 %v711
        %v940 = vunpack.c.l.b16 %v712
        %v941 = vunpack.c.l.b16 %v713
        %v942 = vunpack.c.l.b16 %v714
        %v943 = vunpack.c.l.b16 %v715
        %v944 = vunpack.c.l.b16 %v716
        %v945 = vunpack.c.l.b16 %v717
        %v946 = vunpack.c.l.b16 %v718
        %v947 = vunpack.c.l.b16 %v719
        %v948 = vunpack.c.l.b16 %v720
        %v949 = vunpack.c.l.b16 %v721
        %v950 = vunpack.c.l.b16 %v722
        %v951 = vunpack.c.l.b16 %v723
        %v952 = vunpack.c.l.b16 %v724
        %v953 = vunpack.c.l.b16 %v725
        %v954 = vunpack.c.l.b16 %v726
        %v955 = vunpack.c.l.b16 %v727
        %v956 = vunpack.c.l.b16 %v728
        %v957 = vunpack.c.l.b16 %v729
        %v958 = vunpack.c.l.b16 %v730
        %v959 = vunpack.c.l.b16 %v731
        %v960 = vunpack.c.l.b16 %v732
        %v961 = vunpack.c.l.b16 %v733
        %v962 = vunpack.c.l.b16 %v734
        %v963 = vunpack.c.l.b16 %v735
        %v964 = vunpack.c.l.b16 %v736
        %v965 = vunpack.c.l.b16 %v737
        %v966 = vunpack.c.l.b16 %v738
        %v967 = vunpack.c.l.b16 %v739
        %v968 = vunpack.c.l.b16 %v740
        %v969 = vunpack.c.l.b16 %v741
        %v970 = vunpack.c.l.b16 %v742
        %v971 = vunpack.c.l.b16 %v743
        %v972 = vunpack.c.l.b16 %v744
        %v973 = vunpack.c.l.b16 %v745
        %v974 = vunpack.c.l.b16 %v746
        %v975 = vunpack.c.l.b16 %v747
        %v976 = vunpack.c.l.b16 %v748
        %v977 = vunpack.c.l.b16 %v749
        %v978 = vunpack.c.l.b16 %v750
        %v979 = vunpack.c.l.b16 %v751
        %v980 = vunpack.c.l.b16 %v752
        %v981 = vunpack.c.l.b16 %v753
        %v982 = vunpack.c.l.b16 %v754
        %v983 = vunpack.c.l.b16 %v755
        %v984 = vunpack.c.l.b16 %v756
        %v985 = vunpack.c.l.b16 %v757
        %v986 = vunpack.c.l.b16 %v758
        %v987 = vunpack.c.l.b16 %v759
        %v988 = vunpack.c.l.b16 %v760
        %v989 = vunpack.c.l.b16 %v761
        %v990 = vunpack.c.l.b16 %v762
        %v991 = vunpack.c.l.b16 %v763
        %v992 = vunpack.c.l.b16 %v764
        %v993 = vunpack.c.l.b16 %v765
        %v994 = vunpack.c.l.b16 %v766
        %v995 = vunpack.c.l.b16 %v767
        %v996 = vunpack.c.l.b16 %v768
        %v997 = vunpack.c.l.b16 %v769
        %v998 = vunpack.c.l.b16 %v770
        %v999 = vunpack.c.l.b16 %v771
        %v1000 = vunpack.c.l.b16 %v772
        %v1001 = vunpack.c.l.b16 %v773
        %v1002 = vunpack.c.l.b16 %v774
        %v1003 = vunpack.c.l.b16 %v775
        %v1004 = vunpack.c.l.b16 %v776
        %v1005 = vunpack.c.l.b16 %v777
        %v1006 = vunpack.c.l.b16 %v778
        %v1007 = vunpack.c.l.b16 %v779
        %v1008 = vunpack.c.l.b16 %v780
        %v1009 = vunpack.c.l.b16 %v781
        %v1010 = vunpack.c.l.b16 %v782
        %v1011 = vunpack.c.l.b16 %v783
        %v1012 = vunpack.c.l.b16 %v784
        %v1013 = vunpack.c.l.b16 %v785
        %v1014 = vunpack.c.l.b16 %v786
        %v1015 = vunpack.c.l.b16 %v787
        %v1016 = vunpack.c.l.b16 %v788
        %v1017 = vunpack.c.l.b16 %v789
        %v1018 = vunpack.c.l.b16 %v790
        %v1019 = vunpack.c.l.b16 %v791
        %v1020 = vunpack.c.l.b16 %v792
        %v1021 = vunpack.c.l.b16 %v793
        %v1022 = vunpack.c.l.b16 %v794
        %v1023 = vunpack.c.l.b16 %v795
        %v1024 = vunpack.c.l.b16 %v796
        %v1025 = vunpack.c.l.b16 %v797
        %v1026 = vunpack.c.l.b16 %v798
        %v1027 = vunpack.c.l.b16 %v799
        %v1028 = vunpack.c.l.b16 %v800
        %v1029 = vunpack.c.l.b16 %v801
        %v1030 = vunpack.c.l.b16 %v802
        %v1031 = vunpack.c.l.b16 %v803
        %v1032 = vunpack.c.l.b16 %v804
        %v1033 = vunpack.c.l.b16 %v805
        %v1034 = vunpack.c.l.b16 %v806
        %v1035 = vunpack.c.l.b16 %v807
        %v1036 = vunpack.c.l.b16 %v808
        %v1037 = vunpack.c.l.b16 %v809
        %v1038 = vunpack.c.l.b16 %v810
        %v1039 = vpack.c.b16 %v928, %v927
        %v1040 = vpack.c.b16 %v930, %v929
        %v1041 = vpack.c.b16 %v932, %v931
        %v1042 = vpack.c.b16 %v934, %v933
        %v1043 = vpack.c.b16 %v936, %v935
        %v1044 = vpack.c.b16 %v938, %v937
        %v1045 = vpack.c.b16 %v940, %v939
        %v1046 = vpack.c.b16 %v942, %v941
        %v1047 = vpack.c.b16 %v944, %v943
        %v1048 = vpack.c.b16 %v946, %v945
        %v1049 = vpack.c.b16 %v948, %v947
        %v1050 = vpack.c.b16 %v950, %v949
        %v1051 = vpack.c.b16 %v952, %v951
        %v1052 = vpack.c.b16 %v954, %v953
        %v1053 = vpack.c.b16 %v956, %v955
        %v1054 = vpack.c.b16 %v958, %v957
        %v1055 = vpack.c.b16 %v960, %v959
        %v1056 = vpack.c.b16 %v962, %v961
        %v1057 = vpack.c.b16 %v964, %v963
        %v1058 = vpack.c.b16 %v966, %v965
        %v1059 = vpack.c.b16 %v968, %v967
        %v1060 = vpack.c.b16 %v970, %v969
        %v1061 = vpack.c.b16 %v972, %v971
        %v1062 = vpack.c.b16 %v974, %v973
        %v1063 = vpack.c.b16 %v976, %v975
        %v1064 = vpack.c.b16 %v978, %v977
        %v1065 = vpack.c.b16 %v980, %v979
        %v1066 = vpack.c.b16 %v982, %v981
        %v1067 = vpack.c.b16 %v984, %v983
        %v1068 = vpack.c.b16 %v986, %v985
        %v1069 = vpack.c.b16 %v988, %v987
        %v1070 = vpack.c.b16 %v990, %v989
        %v1071 = vpack.c.b16 %v992, %v991
        %v1072 = vpack.c.b16 %v994, %v993
        %v1073 = vpack.c.b16 %v996, %v995
        %v1074 = vpack.c.b16 %v998, %v997
        %v1075 = vpack.c.b16 %v1000, %v999
        %v1076 = vpack.c.b16 %v1002, %v1001
        %v1077 = vpack.c.b16 %v1004, %v1003
        %v1078 = vpack.c.b16 %v1006, %v1005
        %v1079 = vpack.c.b16 %v1008, %v1007
        %v1080 = vpack.c.b16 %v1010, %v1009
        %v1081 = vpack.c.b16 %v1012, %v1011
        %v1082 = vpack.c.b16 %v1014, %v1013
        %v1083 = vpack.c.b16 %v1016, %v1015
        %v1084 = vpack.c.b16 %v1018, %v1017
        %v1085 = vpack.c.b16 %v1020, %v1019
        %v1086 = vpack.c.b16 %v1022, %v1021
        %v1087 = vpack.c.b16 %v1024, %v1023
        %v1088 = vpack.c.b16 %v1026, %v1025
        %v1089 = vpack.c.b16 %v1028, %v1027
        %v1090 = vpack.c.b16 %v1030, %v1029
        %v1091 = vpack.c.b16 %v1032, %v1031
        %v1092 = vpack.c.b16 %v1034, %v1033
        %v1093 = vpack.c.b16 %v1036, %v1035
        %v1094 = vpack.c.b16 %v1038, %v1037
        %1151 = vmatpush.bf16.msra.mxu0 %v1046
        %1152 = vmatpush.bf16.msra.mxu0 %v1045
        %1153 = vmatpush.bf16.msra.mxu0 %v1044
        %1154 = vmatpush.bf16.msra.mxu0 %v1043
        %1155 = vmatpush.bf16.msra.mxu0 %v1042
        %1156 = vmatpush.bf16.msra.mxu0 %v1041
        %1157 = vmatpush.bf16.msra.mxu0 %v1040
        %1158 = vmatpush.bf16.msra.mxu0 %v1039
        %1159 = vmatmul.bf16.gmra.mxu0 %v692
        %v1160 = vpop.f32.mrf.mxu0
        %v1161 = vadd.f32 %v813, %v1160
        %v1162 = vpop.f32.mrf.mxu0
        %v1163 = vadd.f32 %v813, %v1162
        %1164 = vdwg.mxu0
        %1165 = vmatpush.bf16.msra.mxu0 %v1054
        %1166 = vmatpush.bf16.msra.mxu0 %v1053
        %1167 = vmatpush.bf16.msra.mxu0 %v1052
        %1168 = vmatpush.bf16.msra.mxu0 %v1051
        %1169 = vmatpush.bf16.msra.mxu0 %v1050
        %1170 = vmatpush.bf16.msra.mxu0 %v1049
        %1171 = vmatpush.bf16.msra.mxu0 %v1048
        %1172 = vmatpush.bf16.msra.mxu0 %v1047
        %1173 = vmatmul.bf16.gmra.mxu0 %v693
        %v1174 = vpop.f32.mrf.mxu0
        %v1175 = vadd.f32 %v1161, %v1174
        %v1176 = vpop.f32.mrf.mxu0
        %v1177 = vadd.f32 %v1163, %v1176
        %1178 = vdwg.mxu0
        %1179 = vmatpush.bf16.msra.mxu0 %v1062
        %1180 = vmatpush.bf16.msra.mxu0 %v1061
        %1181 = vmatpush.bf16.msra.mxu0 %v1060
        %1182 = vmatpush.bf16.msra.mxu0 %v1059
        %1183 = vmatpush.bf16.msra.mxu0 %v1058
        %1184 = vmatpush.bf16.msra.mxu0 %v1057
        %1185 = vmatpush.bf16.msra.mxu0 %v1056
        %1186 = vmatpush.bf16.msra.mxu0 %v1055
        %1187 = vmatmul.bf16.gmra.mxu0 %v694
        %v1188 = vpop.f32.mrf.mxu0
        %v1189 = vadd.f32 %v1175, %v1188
        %v1190 = vpop.f32.mrf.mxu0
        %v1191 = vadd.f32 %v1177, %v1190
        %1192 = vdwg.mxu0
        %1193 = vmatpush.bf16.msra.mxu0 %v1070
        %1194 = vmatpush.bf16.msra.mxu0 %v1069
        %1195 = vmatpush.bf16.msra.mxu0 %v1068
        %1196 = vmatpush.bf16.msra.mxu0 %v1067
        %1197 = vmatpush.bf16.msra.mxu0 %v1066
        %1198 = vmatpush.bf16.msra.mxu0 %v1065
        %1199 = vmatpush.bf16.msra.mxu0 %v1064
        %1200 = vmatpush.bf16.msra.mxu0 %v1063
        %1201 = vmatmul.bf16.gmra.mxu0 %v695
        %v1202 = vpop.f32.mrf.mxu0
        %v1203 = vadd.f32 %v1189, %v1202
        %v1204 = vpop.f32.mrf.mxu0
        %v1205 = vadd.f32 %v1191, %v1204
        %1206 = vdwg.mxu0
        %1207 = vmatpush.bf16.msra.mxu0 %v1078
        %1208 = vmatpush.bf16.msra.mxu0 %v1077
        %1209 = vmatpush.bf16.msra.mxu0 %v1076
        %1210 = vmatpush.bf16.msra.mxu0 %v1075
        %1211 = vmatpush.bf16.msra.mxu0 %v1074
        %1212 = vmatpush.bf16.msra.mxu0 %v1073
        %1213 = vmatpush.bf16.msra.mxu0 %v1072
        %1214 = vmatpush.bf16.msra.mxu0 %v1071
        %1215 = vmatmul.bf16.gmra.mxu0 %v696
        %v1216 = vpop.f32.mrf.mxu0
        %v1217 = vadd.f32 %v1203, %v1216
        %v1218 = vpop.f32.mrf.mxu0
        %v1219 = vadd.f32 %v1205, %v1218
        %1220 = vdwg.mxu0
        %1221 = vmatpush.bf16.msra.mxu0 %v1086
        %1222 = vmatpush.bf16.msra.mxu0 %v1085
        %1223 = vmatpush.bf16.msra.mxu0 %v1084
        %1224 = vmatpush.bf16.msra.mxu0 %v1083
        %1225 = vmatpush.bf16.msra.mxu0 %v1082
        %1226 = vmatpush.bf16.msra.mxu0 %v1081
        %1227 = vmatpush.bf16.msra.mxu0 %v1080
        %1228 = vmatpush.bf16.msra.mxu0 %v1079
        %1229 = vmatmul.bf16.gmra.mxu0 %v697
        %v1230 = vpop.f32.mrf.mxu0
        %v1231 = vadd.f32 %v1217, %v1230
        %v1232 = vpop.f32.mrf.mxu0
        %v1233 = vadd.f32 %v1219, %v1232
        %1234 = vdwg.mxu0
        %1235 = vmatpush.bf16.msra.mxu0 %v1094
        %1236 = vmatpush.bf16.msra.mxu0 %v1093
        %1237 = vmatpush.bf16.msra.mxu0 %v1092
        %1238 = vmatpush.bf16.msra.mxu0 %v1091
        %1239 = vmatpush.bf16.msra.mxu0 %v1090
        %1240 = vmatpush.bf16.msra.mxu0 %v1089
        %1241 = vmatpush.bf16.msra.mxu0 %v1088
        %1242 = vmatpush.bf16.msra.mxu0 %v1087
        %1243 = vmatmul.bf16.gmra.mxu0 %v698
        %v1244 = vpop.f32.mrf.mxu0
        %v1245 = vadd.f32 %v1231, %v1244
        %v1246 = vpop.f32.mrf.mxu0
        %v1247 = vadd.f32 %v1233, %v1246
        %1248 = vdwg.mxu0
        %v1249 = vadd.f32 %v1245, %v654
        %v1250 = vadd.f32 %v1247, %v655
        %v1251 = vmax.f32 %v1249, 0.0
        %v1252 = vmax.f32 %v1250, 0.0
        %v1253 = vmax.f32 %v1251, %v1252
        %v1254 = vrot.slane %v1253, 4
        %v1255 = vmax.f32 %v1253, %v1254
        %v1256 = vrot.slane %v1255, 2
        %v1257 = vmax.f32 %v1255, %v1256
        %v1258 = vrot.slane %v1257, 1
        %v1259 = vmax.f32 %v1257, %v1258
        %v1260 = vpack.c.bf16 %v1259, %v1259
        %v1261 = vld [vmem:[%s7] sm:$0xf]
        %v1262 = vld [vmem:[%s7 + $0x4] sm:$0xf]
        %v1263 = vld [vmem:[%s7 + $0x8] sm:$0xf]
        %v1264 = vld [vmem:[%s7 + $0xc] sm:$0xf]
        %v1265 = vld [vmem:[%s7 + $0x10] sm:$0xf]
        %v1266 = vld [vmem:[%s7 + $0x14] sm:$0xf]
        %v1267 = vld [vmem:[%s7 + $0x18] sm:$0xf]
        %v1268 = vld [vmem:[%s7 + $0x1c] sm:$0xf]
        %v1269 = vld [vmem:[%s7 + $0x20] sm:$0xf]
        %v1270 = vld [vmem:[%s7 + $0x24] sm:$0xf]
        %v1271 = vld [vmem:[%s7 + $0x28] sm:$0xf]
        %v1272 = vld [vmem:[%s7 + $0x2c] sm:$0xf]
        %v1273 = vld [vmem:[%s7 + $0x30] sm:$0xf]
        %v1274 = vld [vmem:[%s7 + $0x34] sm:$0xf]
        %v1275 = vld [vmem:[%s7 + $0x38] sm:$0xf]
        %v1276 = vld [vmem:[%s7 + $0x3c] sm:$0xf]
        %v1277 = vld [vmem:[%s8] sm:$0x1]
        %v1294 = vunpack.c.l.b16 %v1261
        %v1295 = vunpack.c.l.b16 %v1262
        %v1296 = vunpack.c.l.b16 %v1263
        %v1297 = vunpack.c.l.b16 %v1264
        %v1298 = vunpack.c.l.b16 %v1265
        %v1299 = vunpack.c.l.b16 %v1266
        %v1300 = vunpack.c.l.b16 %v1267
        %v1301 = vunpack.c.l.b16 %v1268
        %v1302 = vunpack.c.l.b16 %v1269
        %v1303 = vunpack.c.l.b16 %v1270
        %v1304 = vunpack.c.l.b16 %v1271
        %v1305 = vunpack.c.l.b16 %v1272
        %v1306 = vunpack.c.l.b16 %v1273
        %v1307 = vunpack.c.l.b16 %v1274
        %v1308 = vunpack.c.l.b16 %v1275
        %v1309 = vunpack.c.l.b16 %v1276
        %v1310 = vpack.c.b16 %v1295, %v1294
        %v1311 = vpack.c.b16 %v1297, %v1296
        %v1312 = vpack.c.b16 %v1299, %v1298
        %v1313 = vpack.c.b16 %v1301, %v1300
        %v1314 = vpack.c.b16 %v1303, %v1302
        %v1315 = vpack.c.b16 %v1305, %v1304
        %v1316 = vpack.c.b16 %v1307, %v1306
        %v1317 = vpack.c.b16 %v1309, %v1308
        %1326 = vmatpush.bf16.msra.mxu0 %v1317
        %1327 = vmatpush.bf16.msra.mxu0 %v1316
        %1328 = vmatpush.bf16.msra.mxu0 %v1315
        %1329 = vmatpush.bf16.msra.mxu0 %v1314
        %1330 = vmatpush.bf16.msra.mxu0 %v1313
        %1331 = vmatpush.bf16.msra.mxu0 %v1312
        %1332 = vmatpush.bf16.msra.mxu0 %v1311
        %1333 = vmatpush.bf16.msra.mxu0 %v1310
        %1334 = vmatmul.bf16.gmra.mxu0 %v1260
        %v1335 = vpop.f32.mrf.mxu0
        %v1336 = vadd.f32 %v1277, %v1335
        %v1337 = vpop.f32.mrf.mxu0
        %1338 = vdwg.mxu0
        %v1339 = vmax.f32 %v1336, 0.0
        %1340 = vst [vmem:[%s373] sm:$0x1] %v1339
        %s1341 = sand.u32 %s232, 1
        %s1342 = scalar_lea.sflag [#allocation4], %s1341
        %s1343 = sand.u32 %s232, 1
        %s1344 = scalar_lea.vmem [#allocation7], %s1343
        // Predicated region
        $region65: #{tpu_custom_call.1} parent=55 // pred_check
          %p1345 = pneg %p242
        $region66: #{tpu_custom_call.1} parent=55 // pred_check_branch
          %1347 = sbr.rel (%p1345) target = $region68
        $region67: #{tpu_custom_call.1} parent=55 // pred_region
          %1349 = vsyncadd %s1342, 0
          %s1350 = scalar_lea.hbm %s9, %s25
          %s1352 = sshll.u32 %s1344, 4
          %s1353 = int_to_ptr.vmem [resolvable:$true] %s1352
          %s1354 = sshll.u32 %s1350, 4
          %s1355 = int_to_ptr.hbm [resolvable:$true] %s1354
          %1357 = dma.vmem_to_hbm [thread:$0]  %s1353, 16, %s1355, %s1342
        $region68: #{tpu_custom_call.1} parent=55 // pred_fallthru
          _
      $region56: #{tpu_custom_call.1} parent=5 // pred_fallthru
        _
      %p1358 = scmp.le.s32.totalorder 2, %s20
      // Predicated region
      $region69: #{tpu_custom_call.1} parent=5 // pred_check
        %p1359 = pneg %p1358
      $region70: #{tpu_custom_call.1} parent=5 // pred_check_branch
        %1361 = sbr.rel (%p1359) target = $region72
      $region71: #{tpu_custom_call.1} parent=5 // pred_region
        %s1362 = ssub.s32 %s20, 2
        // Predicated region
        $region73: #{tpu_custom_call.1} parent=71 // pred_check
          %p1363 = pneg %p248
        $region74: #{tpu_custom_call.1} parent=71 // pred_check_branch
          %1365 = sbr.rel (%p1363) target = $region76
        $region75: #{tpu_custom_call.1} parent=71 // pred_region
          %s1366 = sand.u32 %s233, 1
          %s1367 = scalar_lea.sflag [#allocation4], %s1366
          %s1368 = sand.u32 %s233, 1
          %s1369 = scalar_lea.vmem [#allocation7], %s1368
          %1371 = dma.done %s1367, 16
        $region76: #{tpu_custom_call.1} parent=71 // pred_fallthru
          _
      $region72: #{tpu_custom_call.1} parent=5 // pred_fallthru
        _
    $region6: #{tpu_custom_call.1} parent=1 // loop_footer
      %s24 = sadd.s32 1, %s20
    $region7: #{tpu_custom_call.1} parent=1 // loop_footer_branch
      %19 = sbr.rel target = $region3
    $region8: #{tpu_custom_call.1} parent=1 // loop_exit
      _
    %1372 = vsyncpa [#allocation3], 1
    %s1373 = scalar_lea.sflag [#allocation3], 1
    %1374 = vsyncpa %s1373, 1
    %1375 = vsyncpa [#allocation6], 1
    %1376 = vsyncpa [#allocation4], 1
    %s1377 = scalar_lea.sflag [#allocation4], 1
    %1378 = vsyncpa %s1377, 1

</llo_original>
